<compile_context>
chip_gen: v7x
topology: tpu7x:2x2x1
jax: 0.10.0
libtpu: 0.0.40
codegen_flags: <defaults>
</compile_context>

<pallas_src>
import functools

import jax
import jax.numpy as jnp
from jax import lax
from jax.experimental import pallas as pl
from jax.experimental.pallas import tpu as pltpu


DICE_EPS = 1e-8


def _dice(x, alpha):
    """Dice activation: sigmoid-gate of batch-normalized input (dim-0 stats)."""
    mean = jnp.mean(x, axis=0, keepdims=True)
    var = jnp.mean((x - mean) ** 2, axis=0, keepdims=True)
    p = jax.nn.sigmoid((x - mean) * lax.rsqrt(var + DICE_EPS))
    return p * x + (1.0 - p) * alpha * x


# -----------------------------------------------------------------------------
# Fused kernel: grid over n_hist.  Per step: ActivationUnit + pooling + running
# top-MLP-layer-1 accumulation; last step runs the rest of the MLP + sigmoid.
# -----------------------------------------------------------------------------
def din_fused_kernel(hist_ref, tgt_ref, aw1_ref, aw2_ref, ascal_ref,
                     feat_ref, w1p_ref, w1f_ref, mw2_ref, mw3_ref, mscal_ref,
                     out_ref, hbuf_ref, zacc_ref,
                     *, batch, seq_len, emb_dim, n_hist, att_hidden,
                     mlp_d1, mlp_d2):
    f32 = jnp.float32
    bf16 = jnp.bfloat16
    i = pl.program_id(0)
    d = emb_dim
    h1 = att_hidden
    grp = seq_len // 4               # seq positions folded per att row
    m_rows = batch * grp             # rows per att operand block

    # Stage this feature's history in f32 once; all further reads hit VMEM.
    hbuf_ref[...] = hist_ref[0].astype(f32)                        # (B*seq, D)

    # Target replicated over the grp row-groups of each batch element: (M, D).
    t = tgt_ref[0].astype(f32)                                     # (B, D)
    t_rep = jnp.broadcast_to(t[:, None, :], (batch, grp, d)).reshape(m_rows, d)
    t_rep_bf = t_rep.astype(bf16)

    w_all = aw1_ref[0]                                             # (5D, h1) bf16
    w_sum = w_all[4 * d:5 * d, :]                                  # sum_j W_j (host packed)

    # Reference att rows = cat([t, h, t-h, t*h], dim=0).view(-1, 4D).  We never build
    # the folded 4D-lane layout:  z1_block = sum_j Op_j @ W_j with Op_j the (M, D)
    # slice of the operand at seq positions s ≡ j (mod 4).  (t-h)@W by linearity.
    z_t = jnp.dot(t_rep_bf, w_sum, preferred_element_type=f32)     # (M, h1)
    z_h = jnp.zeros((m_rows, h1), f32)
    z_p = jnp.zeros((m_rows, h1), f32)
    for j in range(4):
        x_j = hbuf_ref[pl.ds(j, m_rows, stride=4), :]              # (M, D) f32
        w_j = w_all[j * d:(j + 1) * d, :]                          # (D, h1) bf16
        z_h = z_h + jnp.dot(x_j.astype(bf16), w_j, preferred_element_type=f32)
        z_p = z_p + jnp.dot((t_rep * x_j).astype(bf16), w_j,
                            preferred_element_type=f32)
    z_d = z_t - z_h

    asc = ascal_ref[0]                                             # (1, h1+2) f32
    b1 = asc[:, 0:h1]
    alpha = asc[:, h1:h1 + 1]
    b2 = asc[:, h1 + 1:h1 + 2]

    z1 = jnp.concatenate([z_t, z_h, z_d, z_p], axis=0) + b1        # (B*seq, h1)
    z1 = _dice(z1, alpha)
    aw = jnp.dot(z1.astype(bf16), aw2_ref[0],
                 preferred_element_type=f32) + b2                  # (B*seq, 1)

    # (att_weight.view(-1, seq).unsqueeze(-1) * history).sum(dim=1)
    weighted = aw * hbuf_ref[...]                                  # (B*seq, D)
    pool = weighted.reshape(batch, seq_len, d).sum(axis=1)         # (B, D)

    # ---- running top-MLP first layer:  z_acc = mlp_in @ W1 + b1 --------------
    msc = mscal_ref[...]                                           # (1, d1+d2+3)

    @pl.when(i == 0)
    def _():
        # feature block appears twice in mlp_in -> weight rows folded on the host.
        zacc_ref[...] = (jnp.dot(feat_ref[...], w1f_ref[...],
                                 preferred_element_type=f32)
                         + msc[:, 0:mlp_d1])

    zacc_ref[...] += jnp.dot(pool.astype(bf16), w1p_ref[0],
                             preferred_element_type=f32)

    # ---- epilogue on the last grid step --------------------------------------
    @pl.when(i == n_hist - 1)
    def _():
        d1, d2 = mlp_d1, mlp_d2
        ma1 = msc[:, d1:d1 + 1]
        mb2 = msc[:, d1 + 1:d1 + 1 + d2]
        ma2 = msc[:, d1 + 1 + d2:d1 + 2 + d2]
        mb3 = msc[:, d1 + 2 + d2:d1 + 3 + d2]
        z = _dice(zacc_ref[...], ma1)
        z = jnp.dot(z.astype(bf16), mw2_ref[...],
                    preferred_element_type=f32) + mb2
        z = _dice(z, ma2)
        z = jnp.dot(z.astype(bf16), mw3_ref[...],
                    preferred_element_type=f32) + mb3               # (B, 1)
        out_ref[...] = jax.nn.sigmoid(z)


# -----------------------------------------------------------------------------
# DIN forward (embedding lookups / contiguous host folds are XLA glue; attention,
# pooling, top MLP and sigmoid all run inside one pallas_call).
# -----------------------------------------------------------------------------
def din_forward(params, x, *, batch, seq_len, emb_dim, n_feat, n_hist, n_tgt):
    bf16 = jnp.bfloat16

    # Embedding lookups (glue).
    embed_x_features = jnp.stack(
        [params["feat_tables"][j][x["features"][:, j]] for j in range(n_feat)], axis=1)
    embed_x_history = jnp.stack(
        [params["hist_tables"][j][x["history"][:, j]] for j in range(n_hist)], axis=1)
    embed_x_target = jnp.stack(
        [params["tgt_tables"][j][x["target"][:, j]] for j in range(n_tgt)], axis=1)

    assert seq_len % 8 == 0, "seq_len must be a multiple of 8 for this kernel"
    assert n_tgt >= n_hist
    h1 = params["att_w1"].shape[-1]
    d1 = params["mlp_w1"].shape[1]
    d2 = params["mlp_w2"].shape[1]
    f_dim = n_feat * emb_dim
    assert params["mlp_w1"].shape[0] == (n_hist + 2 * n_feat) * emb_dim

    # Single bf16 history copy per feature (flat (b, s) row order); un-broadcast target.
    hist = jnp.transpose(embed_x_history, (1, 0, 2, 3)).reshape(
        n_hist, batch * seq_len, emb_dim).astype(bf16)
    tgt = jnp.transpose(embed_x_target[:, :n_hist], (1, 0, 2)).astype(bf16)
    feat_flat = embed_x_features.reshape(batch, f_dim).astype(bf16)

    # Attention-unit weights: append sum_j W_j (for the target block) on the host.
    aw1 = params["att_w1"]                                          # (n_hist, 4D, h1)
    aw1_sum = aw1.reshape(n_hist, 4, emb_dim, h1).sum(axis=1)       # (n_hist, D, h1)
    aw1_packed = jnp.concatenate([aw1, aw1_sum], axis=1).astype(bf16)
    aw2 = params["att_w2"].astype(bf16)                             # (n_hist, h1, 1)
    att_scal = jnp.concatenate(
        [params["att_b1"], params["att_alpha"], params["att_b2"]], axis=-1)

    # Top-MLP first layer split: per-history-feature row blocks + folded feature rows
    # (the reference concatenates embed_x_features twice -> fold both weight slices).
    base = n_hist * emb_dim
    w1 = params["mlp_w1"]
    w1_pool = w1[:base].reshape(n_hist, emb_dim, d1).astype(bf16)
    w1_feat = (w1[base:base + f_dim] + w1[base + f_dim:base + 2 * f_dim]).astype(bf16)
    mw2 = params["mlp_w2"].astype(bf16)
    mw3 = params["mlp_w3"].astype(bf16)
    mlp_scal = jnp.concatenate(
        [params["mlp_b1"], params["mlp_a1"], params["mlp_b2"],
         params["mlp_a2"], params["mlp_b3"]], axis=-1)               # (1, d1+d2+3)

    bs = batch * seq_len
    est_bytes = (4 * bs * emb_dim * 2        # bf16 history (double buffered)
                 + bs * emb_dim * 4          # f32 staging scratch
                 + 8 * bs * h1 * 4           # z-blocks / z1 / Dice temporaries
                 + 6 * bs * emb_dim * 4      # product / pooling temporaries
                 + (2 << 20))                # weights, scalars, accumulators, slack
    vmem_limit = int(min(64 << 20, max(16 << 20, 2 * est_bytes)))    # v7x-safe cap

    kernel = functools.partial(
        din_fused_kernel, batch=batch, seq_len=seq_len, emb_dim=emb_dim,
        n_hist=n_hist, att_hidden=h1, mlp_d1=d1, mlp_d2=d2)

    y = pl.pallas_call(
        kernel,
        out_shape=jax.ShapeDtypeStruct((batch, 1), jnp.float32),
        grid=(n_hist,),
        in_specs=[
            # per-history-feature blocks
            pl.BlockSpec((1, bs, emb_dim), lambda i: (i, 0, 0)),          # history
            pl.BlockSpec((1, batch, emb_dim), lambda i: (i, 0, 0)),       # target
            pl.BlockSpec((1, 5 * emb_dim, h1), lambda i: (i, 0, 0)),      # att W1 (+sum)
            pl.BlockSpec((1, h1, 1), lambda i: (i, 0, 0)),                # att W2
            pl.BlockSpec((1, 1, h1 + 2), lambda i: (i, 0, 0)),            # att b1|alpha|b2
            # shared blocks (constant index -> DMA'd once, stay VMEM-resident)
            pl.BlockSpec((batch, f_dim), lambda i: (0, 0)),               # features
            pl.BlockSpec((1, emb_dim, d1), lambda i: (i, 0, 0)),          # mlp W1 pool rows
            pl.BlockSpec((f_dim, d1), lambda i: (0, 0)),                  # mlp W1 feat rows
            pl.BlockSpec((d1, d2), lambda i: (0, 0)),                     # mlp W2
            pl.BlockSpec((d2, 1), lambda i: (0, 0)),                      # mlp W3
            pl.BlockSpec((1, d1 + d2 + 3), lambda i: (0, 0)),             # mlp b1|a1|b2|a2|b3
        ],
        out_specs=pl.BlockSpec((batch, 1), lambda i: (0, 0)),
        scratch_shapes=[pltpu.VMEM((bs, emb_dim), jnp.float32),           # f32 history stage
                        pltpu.VMEM((batch, d1), jnp.float32)],            # z_acc
        # grid axis carries the z_acc accumulator and the fused epilogue -> sequential.
        compiler_params=pltpu.CompilerParams(
            dimension_semantics=("arbitrary",),
            vmem_limit_bytes=vmem_limit),
    )(hist, tgt, aw1_packed, aw2, att_scal,
      feat_flat, w1_pool, w1_feat, mw2, mw3, mlp_scal)

    return y[:, 0]                                                   # sigmoid(y).squeeze(1)


# -----------------------------------------------------------------------------
# Pure-jnp f32 reference (mirrors the PyTorch module) used for the self-check.
# -----------------------------------------------------------------------------
def din_reference(params, x, *, batch, seq_len, emb_dim, n_feat, n_hist, n_tgt):
    feats = jnp.stack(
        [params["feat_tables"][j][x["features"][:, j]] for j in range(n_feat)], axis=1)
    hist = jnp.stack(
        [params["hist_tables"][j][x["history"][:, j]] for j in range(n_hist)], axis=1)
    tgt = jnp.stack(
        [params["tgt_tables"][j][x["target"][:, j]] for j in range(n_tgt)], axis=1)
    pools = []
    for i in range(n_hist):
        h = hist[:, i]                                               # (B, seq, D)
        t = jnp.broadcast_to(tgt[:, i][:, None, :], (batch, seq_len, emb_dim))
        att_in = jnp.concatenate([t, h, t - h, t * h], axis=0).reshape(-1, 4 * emb_dim)
        z = att_in @ params["att_w1"][i] + params["att_b1"][i]
        z = _dice(z, params["att_alpha"][i])
        aw = (z @ params["att_w2"][i] + params["att_b2"][i]).reshape(batch, seq_len, 1)
        pools.append((aw * h).sum(axis=1))
    mlp_in = jnp.concatenate(
        pools + [feats.reshape(batch, -1), feats.reshape(batch, -1)], axis=1)
    z = mlp_in @ params["mlp_w1"] + params["mlp_b1"]
    z = _dice(z, params["mlp_a1"])
    z = z @ params["mlp_w2"] + params["mlp_b2"]
    z = _dice(z, params["mlp_a2"])
    z = z @ params["mlp_w3"] + params["mlp_b3"]
    return jax.nn.sigmoid(z)[:, 0]


def init_params(key, *, emb_dim, n_feat, n_hist, n_tgt, vocab, att_hidden,
                mlp_dims, all_dims):
    ks = jax.random.split(key, 16)

    def nrm(k, shape, scale=0.3):
        return (scale * jax.random.normal(k, shape)).astype(jnp.float32)

    return {
        "feat_tables": nrm(ks[0], (n_feat, vocab, emb_dim)),
        "hist_tables": nrm(ks[1], (n_hist, vocab, emb_dim)),
        "tgt_tables":  nrm(ks[2], (n_tgt, vocab, emb_dim)),
        # per-history-feature ActivationUnit MLP (4D -> 36 -> 1, Dice)
        "att_w1":    nrm(ks[3], (n_hist, 4 * emb_dim, att_hidden)),
        "att_b1":    nrm(ks[4], (n_hist, 1, att_hidden)),
        "att_alpha": nrm(ks[5], (n_hist, 1, 1)),
        "att_w2":    nrm(ks[6], (n_hist, att_hidden, 1)),
        "att_b2":    nrm(ks[7], (n_hist, 1, 1)),
        # top MLP (all_dims -> 32 -> 16 -> 1, Dice)
        "mlp_w1": nrm(ks[8],  (all_dims, mlp_dims[0])),
        "mlp_b1": nrm(ks[9],  (1, mlp_dims[0])),
        "mlp_a1": nrm(ks[10], (1, 1)),
        "mlp_w2": nrm(ks[11], (mlp_dims[0], mlp_dims[1])),
        "mlp_b2": nrm(ks[12], (1, mlp_dims[1])),
        "mlp_a2": nrm(ks[13], (1, 1)),
        "mlp_w3": nrm(ks[14], (mlp_dims[1], 1)),
        "mlp_b3": nrm(ks[15], (1, 1)),
    }


if __name__ == "__main__":
    B, SEQ, D = 4, 32, 8
    N_FEAT, N_HIST, N_TGT = 2, 2, 2          # n_feat == n_tgt (required by the MLP width)
    VOCAB = 50
    ATT_HIDDEN = 36                          # ActivationUnit default dims=[36]
    MLP_DIMS = (32, 16)
    ALL_DIMS = (N_FEAT + N_HIST + N_TGT) * D  # 48

    key = jax.random.PRNGKey(0)
    kp, kf, kh, kt = jax.random.split(key, 4)
    params = init_params(kp, emb_dim=D, n_feat=N_FEAT, n_hist=N_HIST, n_tgt=N_TGT,
                         vocab=VOCAB, att_hidden=ATT_HIDDEN, mlp_dims=MLP_DIMS,
                         all_dims=ALL_DIMS)

    x = {
        "features": jax.random.randint(kf, (B, N_FEAT), 0, VOCAB, dtype=jnp.int32),
        "history":  jax.random.randint(kh, (B, N_HIST, SEQ), 0, VOCAB, dtype=jnp.int32),
        "target":   jax.random.randint(kt, (B, N_TGT), 0, VOCAB, dtype=jnp.int32),
    }

    out = din_forward(params, x, batch=B, seq_len=SEQ, emb_dim=D,
                      n_feat=N_FEAT, n_hist=N_HIST, n_tgt=N_TGT)
    out = jax.block_until_ready(out)
    assert out.shape == (B,) and out.dtype == jnp.float32
    assert bool(jnp.all(jnp.isfinite(out)))

    ref = din_reference(params, x, batch=B, seq_len=SEQ, emb_dim=D,
                        n_feat=N_FEAT, n_hist=N_HIST, n_tgt=N_TGT)
    assert float(jnp.max(jnp.abs(out - ref))) < 3e-2, (out, ref)
    print("KERNEL_OK")
</pallas_src>

<mosaic_0001>
module attributes {stable_mosaic.version = 11 : i64} {
  func.func @din_fused_kernel(%arg0: i32, %arg1: memref<1x128x8xbf16, #tpu.memory_space<vmem>>, %arg2: memref<1x4x8xbf16, #tpu.memory_space<vmem>>, %arg3: memref<1x40x36xbf16, #tpu.memory_space<vmem>>, %arg4: memref<1x36x1xbf16, #tpu.memory_space<vmem>>, %arg5: memref<1x1x38xf32, #tpu.memory_space<vmem>>, %arg6: memref<4x16xbf16, #tpu.memory_space<vmem>>, %arg7: memref<1x8x32xbf16, #tpu.memory_space<vmem>>, %arg8: memref<16x32xbf16, #tpu.memory_space<vmem>>, %arg9: memref<32x16xbf16, #tpu.memory_space<vmem>>, %arg10: memref<16x1xbf16, #tpu.memory_space<vmem>>, %arg11: memref<1x51xf32, #tpu.memory_space<vmem>>, %arg12: memref<4x1xf32, #tpu.memory_space<vmem>>, %arg13: memref<128x8xf32, #tpu.memory_space<vmem>>, %arg14: memref<4x32xf32, #tpu.memory_space<vmem>>) attributes {dimension_semantics = [#tpu.dimension_semantics<arbitrary>], iteration_bounds = array<i64: 2>, scalar_prefetch = 0 : i64, scratch_operands = 2 : i64, tpu.core_type = #tpu.core_type<tc>, window_params = [{transform_indices = @transform_0, window_bounds = array<i64: 1, 128, 8>}, {transform_indices = @transform_1, window_bounds = array<i64: 1, 4, 8>}, {transform_indices = @transform_2, window_bounds = array<i64: 1, 40, 36>}, {transform_indices = @transform_3, window_bounds = array<i64: 1, 36, 1>}, {transform_indices = @transform_4, window_bounds = array<i64: 1, 1, 38>}, {pipeline_mode = #tpu.pipeline_mode<synchronous>, transform_indices = @transform_5, window_bounds = array<i64: 4, 16>}, {transform_indices = @transform_6, window_bounds = array<i64: 1, 8, 32>}, {pipeline_mode = #tpu.pipeline_mode<synchronous>, transform_indices = @transform_7, window_bounds = array<i64: 16, 32>}, {pipeline_mode = #tpu.pipeline_mode<synchronous>, transform_indices = @transform_8, window_bounds = array<i64: 32, 16>}, {pipeline_mode = #tpu.pipeline_mode<synchronous>, transform_indices = @transform_9, window_bounds = array<i64: 16, 1>}, {pipeline_mode = #tpu.pipeline_mode<synchronous>, transform_indices = @transform_10, window_bounds = array<i64: 1, 51>}, {pipeline_mode = #tpu.pipeline_mode<synchronous>, transform_indices = @transform_11, window_bounds = array<i64: 4, 1>}]} {
    %c0 = arith.constant 0 : index
    %c0_0 = arith.constant 0 : index
    %c0_1 = arith.constant 0 : index
    %0 = vector.load %arg1[%c0, %c0_0, %c0_1] : memref<1x128x8xbf16, #tpu.memory_space<vmem>>, vector<1x128x8xbf16>
    %1 = vector.shape_cast %0 : vector<1x128x8xbf16> to vector<128x8xbf16>
    %2 = arith.extf %1 : vector<128x8xbf16> to vector<128x8xf32>
    %c0_2 = arith.constant 0 : index
    %c0_3 = arith.constant 0 : index
    %3 = vector.load %arg13[%c0_2, %c0_3] : memref<128x8xf32, #tpu.memory_space<vmem>>, vector<128x8xf32>
    tpu.vector_store %arg13[%c0_2, %c0_3], %2 {strides = array<i32>} : memref<128x8xf32, #tpu.memory_space<vmem>>, vector<128x8xf32>,
    %c0_4 = arith.constant 0 : index
    %c0_5 = arith.constant 0 : index
    %c0_6 = arith.constant 0 : index
    %4 = vector.load %arg2[%c0_4, %c0_5, %c0_6] : memref<1x4x8xbf16, #tpu.memory_space<vmem>>, vector<1x4x8xbf16>
    %5 = vector.shape_cast %4 : vector<1x4x8xbf16> to vector<4x8xbf16>
    %6 = arith.extf %5 : vector<4x8xbf16> to vector<4x8xf32>
    %7 = vector.shape_cast %6 : vector<4x8xf32> to vector<4x1x8xf32>
    %8 = vector.shape_cast %7 : vector<4x1x8xf32> to vector<4x1x8xf32>
    %9 = vector.broadcast %8 : vector<4x1x8xf32> to vector<4x8x8xf32>
    %10 = vector.shape_cast %9 : vector<4x8x8xf32> to vector<32x8xf32>
    %11 = arith.truncf %10 : vector<32x8xf32> to vector<32x8xbf16>
    %c0_7 = arith.constant 0 : index
    %c0_8 = arith.constant 0 : index
    %c0_9 = arith.constant 0 : index
    %12 = vector.load %arg3[%c0_7, %c0_8, %c0_9] : memref<1x40x36xbf16, #tpu.memory_space<vmem>>, vector<1x40x36xbf16>
    %13 = vector.shape_cast %12 : vector<1x40x36xbf16> to vector<40x36xbf16>
    %14 = vector.extract_strided_slice %13 {offsets = [32, 0], sizes = [8, 36], strides = [1, 1]} : vector<40x36xbf16> to vector<8x36xbf16>
    %cst = arith.constant dense<0.000000e+00> : vector<32x36xf32>
    %15 = tpu.matmul %11, %14, %cst {dimension_numbers = #tpu.dot_dimension_numbers<[1], [0], [0], [1], [0, 0, 1, 1], [], []>} : vector<32x8xbf16>, vector<8x36xbf16>, vector<32x36xf32> -> vector<32x36xf32>
    %cst_10 = arith.constant 0.000000e+00 : f32
    %16 = vector.broadcast %cst_10 : f32 to vector<32x36xf32>
    %cst_11 = arith.constant 0.000000e+00 : f32
    %17 = vector.broadcast %cst_11 : f32 to vector<32x36xf32>
    %c0_12 = arith.constant 0 : index
    %c0_13 = arith.constant 0 : index
    %18 = tpu.strided_load %arg13[%c0_12, %c0_13] {strides = array<i32: 4, 1>} : memref<128x8xf32, #tpu.memory_space<vmem>>, vector<32x8xf32>
    %19 = vector.extract_strided_slice %13 {offsets = [0, 0], sizes = [8, 36], strides = [1, 1]} : vector<40x36xbf16> to vector<8x36xbf16>
    %20 = arith.truncf %18 : vector<32x8xf32> to vector<32x8xbf16>
    %cst_14 = arith.constant dense<0.000000e+00> : vector<32x36xf32>
    %21 = tpu.matmul %20, %19, %cst_14 {dimension_numbers = #tpu.dot_dimension_numbers<[1], [0], [0], [1], [0, 0, 1, 1], [], []>} : vector<32x8xbf16>, vector<8x36xbf16>, vector<32x36xf32> -> vector<32x36xf32>
    %22 = arith.addf %16, %21 : vector<32x36xf32>
    %23 = arith.mulf %10, %18 : vector<32x8xf32>
    %24 = arith.truncf %23 : vector<32x8xf32> to vector<32x8xbf16>
    %cst_15 = arith.constant dense<0.000000e+00> : vector<32x36xf32>
    %25 = tpu.matmul %24, %19, %cst_15 {dimension_numbers = #tpu.dot_dimension_numbers<[1], [0], [0], [1], [0, 0, 1, 1], [], []>} : vector<32x8xbf16>, vector<8x36xbf16>, vector<32x36xf32> -> vector<32x36xf32>
    %26 = arith.addf %17, %25 : vector<32x36xf32>
    %c1 = arith.constant 1 : index
    %c0_16 = arith.constant 0 : index
    %27 = tpu.strided_load %arg13[%c1, %c0_16] {strides = array<i32: 4, 1>} : memref<128x8xf32, #tpu.memory_space<vmem>>, vector<32x8xf32>
    %28 = vector.extract_strided_slice %13 {offsets = [8, 0], sizes = [8, 36], strides = [1, 1]} : vector<40x36xbf16> to vector<8x36xbf16>
    %29 = arith.truncf %27 : vector<32x8xf32> to vector<32x8xbf16>
    %cst_17 = arith.constant dense<0.000000e+00> : vector<32x36xf32>
    %30 = tpu.matmul %29, %28, %cst_17 {dimension_numbers = #tpu.dot_dimension_numbers<[1], [0], [0], [1], [0, 0, 1, 1], [], []>} : vector<32x8xbf16>, vector<8x36xbf16>, vector<32x36xf32> -> vector<32x36xf32>
    %31 = arith.addf %22, %30 : vector<32x36xf32>
    %32 = arith.mulf %10, %27 : vector<32x8xf32>
    %33 = arith.truncf %32 : vector<32x8xf32> to vector<32x8xbf16>
    %cst_18 = arith.constant dense<0.000000e+00> : vector<32x36xf32>
    %34 = tpu.matmul %33, %28, %cst_18 {dimension_numbers = #tpu.dot_dimension_numbers<[1], [0], [0], [1], [0, 0, 1, 1], [], []>} : vector<32x8xbf16>, vector<8x36xbf16>, vector<32x36xf32> -> vector<32x36xf32>
    %35 = arith.addf %26, %34 : vector<32x36xf32>
    %c2 = arith.constant 2 : index
    %c0_19 = arith.constant 0 : index
    %36 = tpu.strided_load %arg13[%c2, %c0_19] {strides = array<i32: 4, 1>} : memref<128x8xf32, #tpu.memory_space<vmem>>, vector<32x8xf32>
    %37 = vector.extract_strided_slice %13 {offsets = [16, 0], sizes = [8, 36], strides = [1, 1]} : vector<40x36xbf16> to vector<8x36xbf16>
    %38 = arith.truncf %36 : vector<32x8xf32> to vector<32x8xbf16>
    %cst_20 = arith.constant dense<0.000000e+00> : vector<32x36xf32>
    %39 = tpu.matmul %38, %37, %cst_20 {dimension_numbers = #tpu.dot_dimension_numbers<[1], [0], [0], [1], [0, 0, 1, 1], [], []>} : vector<32x8xbf16>, vector<8x36xbf16>, vector<32x36xf32> -> vector<32x36xf32>
    %40 = arith.addf %31, %39 : vector<32x36xf32>
    %41 = arith.mulf %10, %36 : vector<32x8xf32>
    %42 = arith.truncf %41 : vector<32x8xf32> to vector<32x8xbf16>
    %cst_21 = arith.constant dense<0.000000e+00> : vector<32x36xf32>
    %43 = tpu.matmul %42, %37, %cst_21 {dimension_numbers = #tpu.dot_dimension_numbers<[1], [0], [0], [1], [0, 0, 1, 1], [], []>} : vector<32x8xbf16>, vector<8x36xbf16>, vector<32x36xf32> -> vector<32x36xf32>
    %44 = arith.addf %35, %43 : vector<32x36xf32>
    %c3 = arith.constant 3 : index
    %c0_22 = arith.constant 0 : index
    %45 = tpu.strided_load %arg13[%c3, %c0_22] {strides = array<i32: 4, 1>} : memref<128x8xf32, #tpu.memory_space<vmem>>, vector<32x8xf32>
    %46 = vector.extract_strided_slice %13 {offsets = [24, 0], sizes = [8, 36], strides = [1, 1]} : vector<40x36xbf16> to vector<8x36xbf16>
    %47 = arith.truncf %45 : vector<32x8xf32> to vector<32x8xbf16>
    %cst_23 = arith.constant dense<0.000000e+00> : vector<32x36xf32>
    %48 = tpu.matmul %47, %46, %cst_23 {dimension_numbers = #tpu.dot_dimension_numbers<[1], [0], [0], [1], [0, 0, 1, 1], [], []>} : vector<32x8xbf16>, vector<8x36xbf16>, vector<32x36xf32> -> vector<32x36xf32>
    %49 = arith.addf %40, %48 : vector<32x36xf32>
    %50 = arith.mulf %10, %45 : vector<32x8xf32>
    %51 = arith.truncf %50 : vector<32x8xf32> to vector<32x8xbf16>
    %cst_24 = arith.constant dense<0.000000e+00> : vector<32x36xf32>
    %52 = tpu.matmul %51, %46, %cst_24 {dimension_numbers = #tpu.dot_dimension_numbers<[1], [0], [0], [1], [0, 0, 1, 1], [], []>} : vector<32x8xbf16>, vector<8x36xbf16>, vector<32x36xf32> -> vector<32x36xf32>
    %53 = arith.addf %44, %52 : vector<32x36xf32>
    %54 = arith.subf %15, %49 : vector<32x36xf32>
    %c0_25 = arith.constant 0 : index
    %c0_26 = arith.constant 0 : index
    %c0_27 = arith.constant 0 : index
    %55 = vector.load %arg5[%c0_25, %c0_26, %c0_27] : memref<1x1x38xf32, #tpu.memory_space<vmem>>, vector<1x1x38xf32>
    %56 = vector.shape_cast %55 : vector<1x1x38xf32> to vector<1x38xf32>
    %57 = vector.extract_strided_slice %56 {offsets = [0, 0], sizes = [1, 36], strides = [1, 1]} : vector<1x38xf32> to vector<1x36xf32>
    %58 = vector.extract_strided_slice %56 {offsets = [0, 36], sizes = [1, 1], strides = [1, 1]} : vector<1x38xf32> to vector<1x1xf32>
    %59 = vector.extract_strided_slice %56 {offsets = [0, 37], sizes = [1, 1], strides = [1, 1]} : vector<1x38xf32> to vector<1x1xf32>
    %60 = tpu.concatenate %15, %49, %54, %53 in 0 : vector<32x36xf32>, vector<32x36xf32>, vector<32x36xf32>, vector<32x36xf32> -> vector<128x36xf32>
    %61 = vector.broadcast %57 : vector<1x36xf32> to vector<128x36xf32>
    %62 = arith.addf %60, %61 : vector<128x36xf32>
    %cst_28 = arith.constant dense<0.000000e+00> : vector<36xf32>
    %63 = vector.multi_reduction <add>, %62, %cst_28 [0] : vector<128x36xf32> to vector<36xf32>
    %64 = vector.shape_cast %63 : vector<36xf32> to vector<1x36xf32>
    %cst_29 = arith.constant 1.280000e+02 : f32
    %65 = vector.broadcast %cst_29 : f32 to vector<1x36xf32>
    %66 = arith.divf %64, %65 : vector<1x36xf32>
    %67 = vector.broadcast %66 : vector<1x36xf32> to vector<128x36xf32>
    %68 = arith.subf %62, %67 : vector<128x36xf32>
    %69 = arith.mulf %68, %68 : vector<128x36xf32>
    %cst_30 = arith.constant dense<0.000000e+00> : vector<36xf32>
    %70 = vector.multi_reduction <add>, %69, %cst_30 [0] : vector<128x36xf32> to vector<36xf32>
    %71 = vector.shape_cast %70 : vector<36xf32> to vector<1x36xf32>
    %cst_31 = arith.constant 1.280000e+02 : f32
    %72 = vector.broadcast %cst_31 : f32 to vector<1x36xf32>
    %73 = arith.divf %71, %72 : vector<1x36xf32>
    %74 = vector.broadcast %66 : vector<1x36xf32> to vector<128x36xf32>
    %75 = arith.subf %62, %74 : vector<128x36xf32>
    %cst_32 = arith.constant 9.99999993E-9 : f32
    %76 = vector.broadcast %cst_32 : f32 to vector<1x36xf32>
    %77 = arith.addf %73, %76 : vector<1x36xf32>
    %78 = math.rsqrt %77 : vector<1x36xf32>
    %79 = vector.broadcast %78 : vector<1x36xf32> to vector<128x36xf32>
    %80 = arith.mulf %75, %79 : vector<128x36xf32>
    %81 = arith.negf %80 : vector<128x36xf32>
    %82 = math.exp %81 : vector<128x36xf32>
    %cst_33 = arith.constant 1.000000e+00 : f32
    %83 = vector.broadcast %cst_33 : f32 to vector<128x36xf32>
    %84 = arith.addf %83, %82 : vector<128x36xf32>
    %85 = arith.divf %83, %84 : vector<128x36xf32>
    %86 = arith.mulf %85, %62 : vector<128x36xf32>
    %cst_34 = arith.constant 1.000000e+00 : f32
    %87 = vector.broadcast %cst_34 : f32 to vector<128x36xf32>
    %88 = arith.subf %87, %85 : vector<128x36xf32>
    %89 = vector.broadcast %58 : vector<1x1xf32> to vector<128x36xf32>
    %90 = arith.mulf %88, %89 : vector<128x36xf32>
    %91 = arith.mulf %90, %62 : vector<128x36xf32>
    %92 = arith.addf %86, %91 : vector<128x36xf32>
    %93 = arith.truncf %92 : vector<128x36xf32> to vector<128x36xbf16>
    %c0_35 = arith.constant 0 : index
    %c0_36 = arith.constant 0 : index
    %c0_37 = arith.constant 0 : index
    %94 = vector.load %arg4[%c0_35, %c0_36, %c0_37] : memref<1x36x1xbf16, #tpu.memory_space<vmem>>, vector<1x36x1xbf16>
    %95 = vector.shape_cast %94 : vector<1x36x1xbf16> to vector<36x1xbf16>
    %cst_38 = arith.constant dense<0.000000e+00> : vector<128x1xf32>
    %96 = tpu.matmul %93, %95, %cst_38 {dimension_numbers = #tpu.dot_dimension_numbers<[1], [0], [0], [1], [0, 0, 1, 1], [], []>} : vector<128x36xbf16>, vector<36x1xbf16>, vector<128x1xf32> -> vector<128x1xf32>
    %97 = vector.broadcast %59 : vector<1x1xf32> to vector<128x1xf32>
    %98 = arith.addf %96, %97 : vector<128x1xf32>
    %c0_39 = arith.constant 0 : index
    %c0_40 = arith.constant 0 : index
    %99 = vector.load %arg13[%c0_39, %c0_40] : memref<128x8xf32, #tpu.memory_space<vmem>>, vector<128x8xf32>
    %100 = vector.broadcast %98 : vector<128x1xf32> to vector<128x8xf32>
    %101 = arith.mulf %100, %99 : vector<128x8xf32>
    %102 = vector.shape_cast %101 : vector<128x8xf32> to vector<4x32x8xf32>
    %cst_41 = arith.constant dense<0.000000e+00> : vector<4x8xf32>
    %103 = vector.multi_reduction <add>, %102, %cst_41 [1] : vector<4x32x8xf32> to vector<4x8xf32>
    %c0_42 = arith.constant 0 : index
    %c0_43 = arith.constant 0 : index
    %104 = vector.load %arg11[%c0_42, %c0_43] : memref<1x51xf32, #tpu.memory_space<vmem>>, vector<1x51xf32>
    %c0_i32 = arith.constant 0 : i32
    %105 = arith.cmpi eq, %arg0, %c0_i32 : i32
    %106 = arith.extui %105 : i1 to i32
    %c0_i32_44 = arith.constant 0 : i32
    %107 = arith.cmpi ne, %106, %c0_i32_44 : i32
    scf.if %107 {
      %c0_54 = arith.constant 0 : index
      %c0_55 = arith.constant 0 : index
      %118 = vector.load %arg6[%c0_54, %c0_55] : memref<4x16xbf16, #tpu.memory_space<vmem>>, vector<4x16xbf16>
      %c0_56 = arith.constant 0 : index
      %c0_57 = arith.constant 0 : index
      %119 = vector.load %arg8[%c0_56, %c0_57] : memref<16x32xbf16, #tpu.memory_space<vmem>>, vector<16x32xbf16>
      %cst_58 = arith.constant dense<0.000000e+00> : vector<4x32xf32>
      %120 = tpu.matmul %118, %119, %cst_58 {dimension_numbers = #tpu.dot_dimension_numbers<[1], [0], [0], [1], [0, 0, 1, 1], [], []>} : vector<4x16xbf16>, vector<16x32xbf16>, vector<4x32xf32> -> vector<4x32xf32>
      %121 = vector.extract_strided_slice %104 {offsets = [0, 0], sizes = [1, 32], strides = [1, 1]} : vector<1x51xf32> to vector<1x32xf32>
      %122 = vector.broadcast %121 : vector<1x32xf32> to vector<4x32xf32>
      %123 = arith.addf %120, %122 : vector<4x32xf32>
      %c0_59 = arith.constant 0 : index
      %c0_60 = arith.constant 0 : index
      %124 = vector.load %arg14[%c0_59, %c0_60] : memref<4x32xf32, #tpu.memory_space<vmem>>, vector<4x32xf32>
      tpu.vector_store %arg14[%c0_59, %c0_60], %123 {strides = array<i32>} : memref<4x32xf32, #tpu.memory_space<vmem>>, vector<4x32xf32>,
    } else {
    }
    %c0_45 = arith.constant 0 : index
    %c0_46 = arith.constant 0 : index
    %108 = vector.load %arg14[%c0_45, %c0_46] : memref<4x32xf32, #tpu.memory_space<vmem>>, vector<4x32xf32>
    %109 = arith.truncf %103 : vector<4x8xf32> to vector<4x8xbf16>
    %c0_47 = arith.constant 0 : index
    %c0_48 = arith.constant 0 : index
    %c0_49 = arith.constant 0 : index
    %110 = vector.load %arg7[%c0_47, %c0_48, %c0_49] : memref<1x8x32xbf16, #tpu.memory_space<vmem>>, vector<1x8x32xbf16>
    %111 = vector.shape_cast %110 : vector<1x8x32xbf16> to vector<8x32xbf16>
    %cst_50 = arith.constant dense<0.000000e+00> : vector<4x32xf32>
    %112 = tpu.matmul %109, %111, %cst_50 {dimension_numbers = #tpu.dot_dimension_numbers<[1], [0], [0], [1], [0, 0, 1, 1], [], []>} : vector<4x8xbf16>, vector<8x32xbf16>, vector<4x32xf32> -> vector<4x32xf32>
    %113 = arith.addf %108, %112 : vector<4x32xf32>
    %c0_51 = arith.constant 0 : index
    %c0_52 = arith.constant 0 : index
    %114 = vector.load %arg14[%c0_51, %c0_52] : memref<4x32xf32, #tpu.memory_space<vmem>>, vector<4x32xf32>
    tpu.vector_store %arg14[%c0_51, %c0_52], %113 {strides = array<i32>} : memref<4x32xf32, #tpu.memory_space<vmem>>, vector<4x32xf32>,
    %c1_i32 = arith.constant 1 : i32
    %115 = arith.cmpi eq, %arg0, %c1_i32 : i32
    %116 = arith.extui %115 : i1 to i32
    %c0_i32_53 = arith.constant 0 : i32
    %117 = arith.cmpi ne, %116, %c0_i32_53 : i32
    scf.if %117 {
      %118 = vector.extract_strided_slice %104 {offsets = [0, 32], sizes = [1, 1], strides = [1, 1]} : vector<1x51xf32> to vector<1x1xf32>
      %119 = vector.extract_strided_slice %104 {offsets = [0, 33], sizes = [1, 16], strides = [1, 1]} : vector<1x51xf32> to vector<1x16xf32>
      %120 = vector.extract_strided_slice %104 {offsets = [0, 49], sizes = [1, 1], strides = [1, 1]} : vector<1x51xf32> to vector<1x1xf32>
      %121 = vector.extract_strided_slice %104 {offsets = [0, 50], sizes = [1, 1], strides = [1, 1]} : vector<1x51xf32> to vector<1x1xf32>
      %c0_54 = arith.constant 0 : index
      %c0_55 = arith.constant 0 : index
      %122 = vector.load %arg14[%c0_54, %c0_55] : memref<4x32xf32, #tpu.memory_space<vmem>>, vector<4x32xf32>
      %cst_56 = arith.constant dense<0.000000e+00> : vector<32xf32>
      %123 = vector.multi_reduction <add>, %122, %cst_56 [0] : vector<4x32xf32> to vector<32xf32>
      %124 = vector.shape_cast %123 : vector<32xf32> to vector<1x32xf32>
      %cst_57 = arith.constant 4.000000e+00 : f32
      %125 = vector.broadcast %cst_57 : f32 to vector<1x32xf32>
      %126 = arith.divf %124, %125 : vector<1x32xf32>
      %127 = vector.broadcast %126 : vector<1x32xf32> to vector<4x32xf32>
      %128 = arith.subf %122, %127 : vector<4x32xf32>
      %129 = arith.mulf %128, %128 : vector<4x32xf32>
      %cst_58 = arith.constant dense<0.000000e+00> : vector<32xf32>
      %130 = vector.multi_reduction <add>, %129, %cst_58 [0] : vector<4x32xf32> to vector<32xf32>
      %131 = vector.shape_cast %130 : vector<32xf32> to vector<1x32xf32>
      %cst_59 = arith.constant 4.000000e+00 : f32
      %132 = vector.broadcast %cst_59 : f32 to vector<1x32xf32>
      %133 = arith.divf %131, %132 : vector<1x32xf32>
      %134 = vector.broadcast %126 : vector<1x32xf32> to vector<4x32xf32>
      %135 = arith.subf %122, %134 : vector<4x32xf32>
      %cst_60 = arith.constant 9.99999993E-9 : f32
      %136 = vector.broadcast %cst_60 : f32 to vector<1x32xf32>
      %137 = arith.addf %133, %136 : vector<1x32xf32>
      %138 = math.rsqrt %137 : vector<1x32xf32>
      %139 = vector.broadcast %138 : vector<1x32xf32> to vector<4x32xf32>
      %140 = arith.mulf %135, %139 : vector<4x32xf32>
      %141 = arith.negf %140 : vector<4x32xf32>
      %142 = math.exp %141 : vector<4x32xf32>
      %cst_61 = arith.constant 1.000000e+00 : f32
      %143 = vector.broadcast %cst_61 : f32 to vector<4x32xf32>
      %144 = arith.addf %143, %142 : vector<4x32xf32>
      %145 = arith.divf %143, %144 : vector<4x32xf32>
      %146 = arith.mulf %145, %122 : vector<4x32xf32>
      %cst_62 = arith.constant 1.000000e+00 : f32
      %147 = vector.broadcast %cst_62 : f32 to vector<4x32xf32>
      %148 = arith.subf %147, %145 : vector<4x32xf32>
      %149 = vector.broadcast %118 : vector<1x1xf32> to vector<4x32xf32>
      %150 = arith.mulf %148, %149 : vector<4x32xf32>
      %151 = arith.mulf %150, %122 : vector<4x32xf32>
      %152 = arith.addf %146, %151 : vector<4x32xf32>
      %153 = arith.truncf %152 : vector<4x32xf32> to vector<4x32xbf16>
      %c0_63 = arith.constant 0 : index
      %c0_64 = arith.constant 0 : index
      %154 = vector.load %arg9[%c0_63, %c0_64] : memref<32x16xbf16, #tpu.memory_space<vmem>>, vector<32x16xbf16>
      %cst_65 = arith.constant dense<0.000000e+00> : vector<4x16xf32>
      %155 = tpu.matmul %153, %154, %cst_65 {dimension_numbers = #tpu.dot_dimension_numbers<[1], [0], [0], [1], [0, 0, 1, 1], [], []>} : vector<4x32xbf16>, vector<32x16xbf16>, vector<4x16xf32> -> vector<4x16xf32>
      %156 = vector.broadcast %119 : vector<1x16xf32> to vector<4x16xf32>
      %157 = arith.addf %155, %156 : vector<4x16xf32>
      %cst_66 = arith.constant dense<0.000000e+00> : vector<16xf32>
      %158 = vector.multi_reduction <add>, %157, %cst_66 [0] : vector<4x16xf32> to vector<16xf32>
      %159 = vector.shape_cast %158 : vector<16xf32> to vector<1x16xf32>
      %cst_67 = arith.constant 4.000000e+00 : f32
      %160 = vector.broadcast %cst_67 : f32 to vector<1x16xf32>
      %161 = arith.divf %159, %160 : vector<1x16xf32>
      %162 = vector.broadcast %161 : vector<1x16xf32> to vector<4x16xf32>
      %163 = arith.subf %157, %162 : vector<4x16xf32>
      %164 = arith.mulf %163, %163 : vector<4x16xf32>
      %cst_68 = arith.constant dense<0.000000e+00> : vector<16xf32>
      %165 = vector.multi_reduction <add>, %164, %cst_68 [0] : vector<4x16xf32> to vector<16xf32>
      %166 = vector.shape_cast %165 : vector<16xf32> to vector<1x16xf32>
      %cst_69 = arith.constant 4.000000e+00 : f32
      %167 = vector.broadcast %cst_69 : f32 to vector<1x16xf32>
      %168 = arith.divf %166, %167 : vector<1x16xf32>
      %169 = vector.broadcast %161 : vector<1x16xf32> to vector<4x16xf32>
      %170 = arith.subf %157, %169 : vector<4x16xf32>
      %cst_70 = arith.constant 9.99999993E-9 : f32
      %171 = vector.broadcast %cst_70 : f32 to vector<1x16xf32>
      %172 = arith.addf %168, %171 : vector<1x16xf32>
      %173 = math.rsqrt %172 : vector<1x16xf32>
      %174 = vector.broadcast %173 : vector<1x16xf32> to vector<4x16xf32>
      %175 = arith.mulf %170, %174 : vector<4x16xf32>
      %176 = arith.negf %175 : vector<4x16xf32>
      %177 = math.exp %176 : vector<4x16xf32>
      %cst_71 = arith.constant 1.000000e+00 : f32
      %178 = vector.broadcast %cst_71 : f32 to vector<4x16xf32>
      %179 = arith.addf %178, %177 : vector<4x16xf32>
      %180 = arith.divf %178, %179 : vector<4x16xf32>
      %181 = arith.mulf %180, %157 : vector<4x16xf32>
      %cst_72 = arith.constant 1.000000e+00 : f32
      %182 = vector.broadcast %cst_72 : f32 to vector<4x16xf32>
      %183 = arith.subf %182, %180 : vector<4x16xf32>
      %184 = vector.broadcast %120 : vector<1x1xf32> to vector<4x16xf32>
      %185 = arith.mulf %183, %184 : vector<4x16xf32>
      %186 = arith.mulf %185, %157 : vector<4x16xf32>
      %187 = arith.addf %181, %186 : vector<4x16xf32>
      %188 = arith.truncf %187 : vector<4x16xf32> to vector<4x16xbf16>
      %c0_73 = arith.constant 0 : index
      %c0_74 = arith.constant 0 : index
      %189 = vector.load %arg10[%c0_73, %c0_74] : memref<16x1xbf16, #tpu.memory_space<vmem>>, vector<16x1xbf16>
      %cst_75 = arith.constant dense<0.000000e+00> : vector<4x1xf32>
      %190 = tpu.matmul %188, %189, %cst_75 {dimension_numbers = #tpu.dot_dimension_numbers<[1], [0], [0], [1], [0, 0, 1, 1], [], []>} : vector<4x16xbf16>, vector<16x1xbf16>, vector<4x1xf32> -> vector<4x1xf32>
      %191 = vector.broadcast %121 : vector<1x1xf32> to vector<4x1xf32>
      %192 = arith.addf %190, %191 : vector<4x1xf32>
      %193 = arith.negf %192 : vector<4x1xf32>
      %194 = math.exp %193 : vector<4x1xf32>
      %cst_76 = arith.constant 1.000000e+00 : f32
      %195 = vector.broadcast %cst_76 : f32 to vector<4x1xf32>
      %196 = arith.addf %195, %194 : vector<4x1xf32>
      %197 = arith.divf %195, %196 : vector<4x1xf32>
      %c0_77 = arith.constant 0 : index
      %c0_78 = arith.constant 0 : index
      %198 = vector.load %arg12[%c0_77, %c0_78] : memref<4x1xf32, #tpu.memory_space<vmem>>, vector<4x1xf32>
      tpu.vector_store %arg12[%c0_77, %c0_78], %197 {strides = array<i32>} : memref<4x1xf32, #tpu.memory_space<vmem>>, vector<4x1xf32>,
    } else {
    }
    return
  }
  func.func @transform_0(%arg0: i32) -> (i32, i32, i32) {
    %c0_i32 = arith.constant 0 : i32
    %c0_i32_0 = arith.constant 0 : i32
    %c0_i32_1 = arith.constant 0 : i32
    return %arg0, %c0_i32, %c0_i32_0 : i32, i32, i32
  }
  func.func @transform_1(%arg0: i32) -> (i32, i32, i32) {
    %c0_i32 = arith.constant 0 : i32
    %c0_i32_0 = arith.constant 0 : i32
    %c0_i32_1 = arith.constant 0 : i32
    return %arg0, %c0_i32, %c0_i32_0 : i32, i32, i32
  }
  func.func @transform_2(%arg0: i32) -> (i32, i32, i32) {
    %c0_i32 = arith.constant 0 : i32
    %c0_i32_0 = arith.constant 0 : i32
    %c0_i32_1 = arith.constant 0 : i32
    return %arg0, %c0_i32, %c0_i32_0 : i32, i32, i32
  }
  func.func @transform_3(%arg0: i32) -> (i32, i32, i32) {
    %c0_i32 = arith.constant 0 : i32
    %c0_i32_0 = arith.constant 0 : i32
    %c0_i32_1 = arith.constant 0 : i32
    return %arg0, %c0_i32, %c0_i32_0 : i32, i32, i32
  }
  func.func @transform_4(%arg0: i32) -> (i32, i32, i32) {
    %c0_i32 = arith.constant 0 : i32
    %c0_i32_0 = arith.constant 0 : i32
    %c0_i32_1 = arith.constant 0 : i32
    return %arg0, %c0_i32, %c0_i32_0 : i32, i32, i32
  }
  func.func @transform_5(%arg0: i32) -> (i32, i32) {
    %c0_i32 = arith.constant 0 : i32
    %c0_i32_0 = arith.constant 0 : i32
    %c0_i32_1 = arith.constant 0 : i32
    return %c0_i32, %c0_i32_0 : i32, i32
  }
  func.func @transform_6(%arg0: i32) -> (i32, i32, i32) {
    %c0_i32 = arith.constant 0 : i32
    %c0_i32_0 = arith.constant 0 : i32
    %c0_i32_1 = arith.constant 0 : i32
    return %arg0, %c0_i32, %c0_i32_0 : i32, i32, i32
  }
  func.func @transform_7(%arg0: i32) -> (i32, i32) {
    %c0_i32 = arith.constant 0 : i32
    %c0_i32_0 = arith.constant 0 : i32
    %c0_i32_1 = arith.constant 0 : i32
    return %c0_i32, %c0_i32_0 : i32, i32
  }
  func.func @transform_8(%arg0: i32) -> (i32, i32) {
    %c0_i32 = arith.constant 0 : i32
    %c0_i32_0 = arith.constant 0 : i32
    %c0_i32_1 = arith.constant 0 : i32
    return %c0_i32, %c0_i32_0 : i32, i32
  }
  func.func @transform_9(%arg0: i32) -> (i32, i32) {
    %c0_i32 = arith.constant 0 : i32
    %c0_i32_0 = arith.constant 0 : i32
    %c0_i32_1 = arith.constant 0 : i32
    return %c0_i32, %c0_i32_0 : i32, i32
  }
  func.func @transform_10(%arg0: i32) -> (i32, i32) {
    %c0_i32 = arith.constant 0 : i32
    %c0_i32_0 = arith.constant 0 : i32
    %c0_i32_1 = arith.constant 0 : i32
    return %c0_i32, %c0_i32_0 : i32, i32
  }
  func.func @transform_11(%arg0: i32) -> (i32, i32) {
    %c0_i32 = arith.constant 0 : i32
    %c0_i32_0 = arith.constant 0 : i32
    %c0_i32_1 = arith.constant 0 : i32
    return %c0_i32, %c0_i32_0 : i32, i32
  }
}

</mosaic_0001>

<llo_original>
// kernel: tpu_custom_call.1
$region0: #{tpu_custom_call.1}
  #allocation0 [shape = 'u32[]', space=smem, size = 0x4, offset = 0x4, fixed_abs, tag = 'smem constant byte address 0x4 - core index']
  #allocation1 [shape = 'u32[144,128]{1,0:T(1,128)}', space=vmem, size = 0x12000, scoped, tag = 'internal scratch']
  #allocation2 [shape = 'f32[128,8]{1,0:T(8,128)}', space=vmem, size = 0x10000, scoped, tag = 'scratch operand']
  #allocation3 [shape = 'f32[4,32]{1,0:T(4,128)}', space=vmem, size = 0x800, scoped, tag = 'scratch operand']
  %s0 = inlined_call_operand.vmem [shape: bf16[2,128,8], index: 0, kind: input, shape index: {}]
  %s1 = inlined_call_operand.vmem [shape: bf16[2,4,8], index: 1, kind: input, shape index: {}]
  %s2 = inlined_call_operand.vmem [shape: bf16[2,40,36], index: 2, kind: input, shape index: {}]
  %s3 = inlined_call_operand.vmem [shape: bf16[2,36,1], index: 3, kind: input, shape index: {}]
  %s4 = inlined_call_operand.vmem [shape: f32[2,1,38], index: 4, kind: input, shape index: {}]
  %s5 = inlined_call_operand.vmem [shape: bf16[4,16], index: 5, kind: input, shape index: {}]
  %s6 = inlined_call_operand.vmem [shape: bf16[2,8,32], index: 6, kind: input, shape index: {}]
  %s7 = inlined_call_operand.vmem [shape: bf16[16,32], index: 7, kind: input, shape index: {}]
  %s8 = inlined_call_operand.vmem [shape: bf16[32,16], index: 8, kind: input, shape index: {}]
  %s9 = inlined_call_operand.vmem [shape: bf16[16,1], index: 9, kind: input, shape index: {}]
  %s10 = inlined_call_operand.vmem [shape: f32[1,51], index: 10, kind: input, shape index: {}]
  %s11 = inlined_call_operand.vmem [shape: f32[4,1], index: 11, kind: output, shape index: {}]
  %s12 = sld [smem:[#allocation0]]
  $region85: #{tpu_custom_call.1} parent=0
    _
  %s14 = ssub.s32 1, %s12
  %s15 = scalar_select 0, %s14, %s12
  loop: start=0, step=1, limit=4
  $region2: #{tpu_custom_call.1} parent=0 // loop_pre_header
    _
  $region3: #{tpu_custom_call.1} parent=0 // loop_header
    %s17 = sphi 0, %s21
    %p18 = scmp.ge.s32.totalorder %s17, 4
    %s27 = sphi 0, %s29
    %s30 = sphi 0, %s27
    %s31 = sphi 0, %s30
    %s47 = sphi 0, %s31
    %s53 = sphi 0, %s55
    %s56 = sphi 0, %s53
    %s57 = sphi 0, %s56
    %s73 = sphi 0, %s57
    %s79 = sphi 0, %s81
    %s82 = sphi 0, %s79
    %s83 = sphi 0, %s82
    %s99 = sphi 0, %s83
    %s105 = sphi 0, %s107
    %s108 = sphi 0, %s105
    %s109 = sphi 0, %s108
    %s125 = sphi 0, %s109
    %s131 = sphi 0, %s133
    %s134 = sphi 0, %s131
    %s135 = sphi 0, %s134
    %s151 = sphi 0, %s135
    %s155 = sphi 0, %s155
    %s157 = sphi 0, %s155
    %s158 = sphi 0, %s157
    %s172 = sphi 0, %s158
    %s178 = sphi 0, %s180
    %s181 = sphi 0, %s178
    %s182 = sphi 0, %s181
    %s198 = sphi 0, %s182
    %s202 = sphi 0, %s202
    %s204 = sphi 0, %s202
    %s205 = sphi 0, %s204
    %s219 = sphi 0, %s205
    %s223 = sphi 0, %s223
    %s225 = sphi 0, %s223
    %s226 = sphi 0, %s225
    %s240 = sphi 0, %s226
    %s244 = sphi 0, %s244
    %s246 = sphi 0, %s244
    %s247 = sphi 0, %s246
    %s261 = sphi 0, %s247
    %s265 = sphi 0, %s265
    %s267 = sphi 0, %s265
    %s268 = sphi 0, %s267
    %s282 = sphi 0, %s268
    %s286 = sphi 0, %s286
    %s288 = sphi 0, %s286
    %s289 = sphi 0, %s288
    %s303 = sphi 0, %s289
  $region4: #{tpu_custom_call.1} parent=0 // loop_header_branch
    %20 = sbr.rel (%p18) target = $region8
  $region5: #{tpu_custom_call.1} parent=0 // loop_body
    %s22 = ssub.s32 %s17, 1
    %s23 = ssub.s32 %s17, 2
    %s24 = sadd.s32 %s17, 1
    %s25 = ssub.s32 %s17, %s24
    %p26 = scmp.eq.s32.totalorder %s25, 0
    %s28 = sadd.s32 %s27, 1
    %s29 = scalar_select %p26, %s27, %s28
    %p32 = pneg %p26
    %p33 = scmp.eq.s32.totalorder %s17, 1
    %p34 = por %p32, %p33
    %p35 = scmp.ne.s32.totalorder %s27, %s30
    %p36 = scmp.eq.s32.totalorder %s17, 0
    %p37 = por %p35, %p36
    %p38 = scmp.ne.s32.totalorder %s27, %s30
    %p39 = scmp.eq.s32.totalorder %s22, 1
    %p40 = por %p38, %p39
    %p41 = scmp.ne.s32.totalorder %s30, %s31
    %p42 = scmp.eq.s32.totalorder %s22, 0
    %p43 = por %p41, %p42
    %p44 = scmp.ne.s32.totalorder %s30, %s31
    %p45 = scmp.eq.s32.totalorder %s23, 1
    %p46 = por %p44, %p45
    %p48 = scmp.ne.s32.totalorder %s31, %s47
    %p49 = scmp.eq.s32.totalorder %s23, 0
    %p50 = por %p48, %p49
    %s51 = ssub.s32 %s17, %s24
    %p52 = scmp.eq.s32.totalorder %s51, 0
    %s54 = sadd.s32 %s53, 1
    %s55 = scalar_select %p52, %s53, %s54
    %p58 = pneg %p52
    %p59 = scmp.eq.s32.totalorder %s17, 1
    %p60 = por %p58, %p59
    %p61 = scmp.ne.s32.totalorder %s53, %s56
    %p62 = scmp.eq.s32.totalorder %s17, 0
    %p63 = por %p61, %p62
    %p64 = scmp.ne.s32.totalorder %s53, %s56
    %p65 = scmp.eq.s32.totalorder %s22, 1
    %p66 = por %p64, %p65
    %p67 = scmp.ne.s32.totalorder %s56, %s57
    %p68 = scmp.eq.s32.totalorder %s22, 0
    %p69 = por %p67, %p68
    %p70 = scmp.ne.s32.totalorder %s56, %s57
    %p71 = scmp.eq.s32.totalorder %s23, 1
    %p72 = por %p70, %p71
    %p74 = scmp.ne.s32.totalorder %s57, %s73
    %p75 = scmp.eq.s32.totalorder %s23, 0
    %p76 = por %p74, %p75
    %s77 = ssub.s32 %s17, %s24
    %p78 = scmp.eq.s32.totalorder %s77, 0
    %s80 = sadd.s32 %s79, 1
    %s81 = scalar_select %p78, %s79, %s80
    %p84 = pneg %p78
    %p85 = scmp.eq.s32.totalorder %s17, 1
    %p86 = por %p84, %p85
    %p87 = scmp.ne.s32.totalorder %s79, %s82
    %p88 = scmp.eq.s32.totalorder %s17, 0
    %p89 = por %p87, %p88
    %p90 = scmp.ne.s32.totalorder %s79, %s82
    %p91 = scmp.eq.s32.totalorder %s22, 1
    %p92 = por %p90, %p91
    %p93 = scmp.ne.s32.totalorder %s82, %s83
    %p94 = scmp.eq.s32.totalorder %s22, 0
    %p95 = por %p93, %p94
    %p96 = scmp.ne.s32.totalorder %s82, %s83
    %p97 = scmp.eq.s32.totalorder %s23, 1
    %p98 = por %p96, %p97
    %p100 = scmp.ne.s32.totalorder %s83, %s99
    %p101 = scmp.eq.s32.totalorder %s23, 0
    %p102 = por %p100, %p101
    %s103 = ssub.s32 %s17, %s24
    %p104 = scmp.eq.s32.totalorder %s103, 0
    %s106 = sadd.s32 %s105, 1
    %s107 = scalar_select %p104, %s105, %s106
    %p110 = pneg %p104
    %p111 = scmp.eq.s32.totalorder %s17, 1
    %p112 = por %p110, %p111
    %p113 = scmp.ne.s32.totalorder %s105, %s108
    %p114 = scmp.eq.s32.totalorder %s17, 0
    %p115 = por %p113, %p114
    %p116 = scmp.ne.s32.totalorder %s105, %s108
    %p117 = scmp.eq.s32.totalorder %s22, 1
    %p118 = por %p116, %p117
    %p119 = scmp.ne.s32.totalorder %s108, %s109
    %p120 = scmp.eq.s32.totalorder %s22, 0
    %p121 = por %p119, %p120
    %p122 = scmp.ne.s32.totalorder %s108, %s109
    %p123 = scmp.eq.s32.totalorder %s23, 1
    %p124 = por %p122, %p123
    %p126 = scmp.ne.s32.totalorder %s109, %s125
    %p127 = scmp.eq.s32.totalorder %s23, 0
    %p128 = por %p126, %p127
    %s129 = ssub.s32 %s17, %s24
    %p130 = scmp.eq.s32.totalorder %s129, 0
    %s132 = sadd.s32 %s131, 1
    %s133 = scalar_select %p130, %s131, %s132
    %p136 = pneg %p130
    %p137 = scmp.eq.s32.totalorder %s17, 1
    %p138 = por %p136, %p137
    %p139 = scmp.ne.s32.totalorder %s131, %s134
    %p140 = scmp.eq.s32.totalorder %s17, 0
    %p141 = por %p139, %p140
    %p142 = scmp.ne.s32.totalorder %s131, %s134
    %p143 = scmp.eq.s32.totalorder %s22, 1
    %p144 = por %p142, %p143
    %p145 = scmp.ne.s32.totalorder %s134, %s135
    %p146 = scmp.eq.s32.totalorder %s22, 0
    %p147 = por %p145, %p146
    %p148 = scmp.ne.s32.totalorder %s134, %s135
    %p149 = scmp.eq.s32.totalorder %s23, 1
    %p150 = por %p148, %p149
    %p152 = scmp.ne.s32.totalorder %s135, %s151
    %p153 = scmp.eq.s32.totalorder %s23, 0
    %p154 = por %p152, %p153
    %s156 = sadd.s32 %s155, 1
    %p159 = scmp.eq.s32.totalorder %s17, 1
    %p160 = scmp.ne.s32.totalorder %s155, %s157
    %p161 = scmp.eq.s32.totalorder %s17, 0
    %p162 = por %p160, %p161
    %p163 = scmp.ne.s32.totalorder %s155, %s157
    %p164 = scmp.eq.s32.totalorder %s22, 1
    %p165 = por %p163, %p164
    %p166 = scmp.ne.s32.totalorder %s157, %s158
    %p167 = scmp.eq.s32.totalorder %s22, 0
    %p168 = por %p166, %p167
    %p169 = scmp.ne.s32.totalorder %s157, %s158
    %p170 = scmp.eq.s32.totalorder %s23, 1
    %p171 = por %p169, %p170
    %p173 = scmp.ne.s32.totalorder %s158, %s172
    %p174 = scmp.eq.s32.totalorder %s23, 0
    %p175 = por %p173, %p174
    %s176 = ssub.s32 %s17, %s24
    %p177 = scmp.eq.s32.totalorder %s176, 0
    %s179 = sadd.s32 %s178, 1
    %s180 = scalar_select %p177, %s178, %s179
    %p183 = pneg %p177
    %p184 = scmp.eq.s32.totalorder %s17, 1
    %p185 = por %p183, %p184
    %p186 = scmp.ne.s32.totalorder %s178, %s181
    %p187 = scmp.eq.s32.totalorder %s17, 0
    %p188 = por %p186, %p187
    %p189 = scmp.ne.s32.totalorder %s178, %s181
    %p190 = scmp.eq.s32.totalorder %s22, 1
    %p191 = por %p189, %p190
    %p192 = scmp.ne.s32.totalorder %s181, %s182
    %p193 = scmp.eq.s32.totalorder %s22, 0
    %p194 = por %p192, %p193
    %p195 = scmp.ne.s32.totalorder %s181, %s182
    %p196 = scmp.eq.s32.totalorder %s23, 1
    %p197 = por %p195, %p196
    %p199 = scmp.ne.s32.totalorder %s182, %s198
    %p200 = scmp.eq.s32.totalorder %s23, 0
    %p201 = por %p199, %p200
    %s203 = sadd.s32 %s202, 1
    %p206 = scmp.eq.s32.totalorder %s17, 1
    %p207 = scmp.ne.s32.totalorder %s202, %s204
    %p208 = scmp.eq.s32.totalorder %s17, 0
    %p209 = por %p207, %p208
    %p210 = scmp.ne.s32.totalorder %s202, %s204
    %p211 = scmp.eq.s32.totalorder %s22, 1
    %p212 = por %p210, %p211
    %p213 = scmp.ne.s32.totalorder %s204, %s205
    %p214 = scmp.eq.s32.totalorder %s22, 0
    %p215 = por %p213, %p214
    %p216 = scmp.ne.s32.totalorder %s204, %s205
    %p217 = scmp.eq.s32.totalorder %s23, 1
    %p218 = por %p216, %p217
    %p220 = scmp.ne.s32.totalorder %s205, %s219
    %p221 = scmp.eq.s32.totalorder %s23, 0
    %p222 = por %p220, %p221
    %s224 = sadd.s32 %s223, 1
    %p227 = scmp.eq.s32.totalorder %s17, 1
    %p228 = scmp.ne.s32.totalorder %s223, %s225
    %p229 = scmp.eq.s32.totalorder %s17, 0
    %p230 = por %p228, %p229
    %p231 = scmp.ne.s32.totalorder %s223, %s225
    %p232 = scmp.eq.s32.totalorder %s22, 1
    %p233 = por %p231, %p232
    %p234 = scmp.ne.s32.totalorder %s225, %s226
    %p235 = scmp.eq.s32.totalorder %s22, 0
    %p236 = por %p234, %p235
    %p237 = scmp.ne.s32.totalorder %s225, %s226
    %p238 = scmp.eq.s32.totalorder %s23, 1
    %p239 = por %p237, %p238
    %p241 = scmp.ne.s32.totalorder %s226, %s240
    %p242 = scmp.eq.s32.totalorder %s23, 0
    %p243 = por %p241, %p242
    %s245 = sadd.s32 %s244, 1
    %p248 = scmp.eq.s32.totalorder %s17, 1
    %p249 = scmp.ne.s32.totalorder %s244, %s246
    %p250 = scmp.eq.s32.totalorder %s17, 0
    %p251 = por %p249, %p250
    %p252 = scmp.ne.s32.totalorder %s244, %s246
    %p253 = scmp.eq.s32.totalorder %s22, 1
    %p254 = por %p252, %p253
    %p255 = scmp.ne.s32.totalorder %s246, %s247
    %p256 = scmp.eq.s32.totalorder %s22, 0
    %p257 = por %p255, %p256
    %p258 = scmp.ne.s32.totalorder %s246, %s247
    %p259 = scmp.eq.s32.totalorder %s23, 1
    %p260 = por %p258, %p259
    %p262 = scmp.ne.s32.totalorder %s247, %s261
    %p263 = scmp.eq.s32.totalorder %s23, 0
    %p264 = por %p262, %p263
    %s266 = sadd.s32 %s265, 1
    %p269 = scmp.eq.s32.totalorder %s17, 1
    %p270 = scmp.ne.s32.totalorder %s265, %s267
    %p271 = scmp.eq.s32.totalorder %s17, 0
    %p272 = por %p270, %p271
    %p273 = scmp.ne.s32.totalorder %s265, %s267
    %p274 = scmp.eq.s32.totalorder %s22, 1
    %p275 = por %p273, %p274
    %p276 = scmp.ne.s32.totalorder %s267, %s268
    %p277 = scmp.eq.s32.totalorder %s22, 0
    %p278 = por %p276, %p277
    %p279 = scmp.ne.s32.totalorder %s267, %s268
    %p280 = scmp.eq.s32.totalorder %s23, 1
    %p281 = por %p279, %p280
    %p283 = scmp.ne.s32.totalorder %s268, %s282
    %p284 = scmp.eq.s32.totalorder %s23, 0
    %p285 = por %p283, %p284
    %s287 = sadd.s32 %s286, 1
    %p290 = scmp.eq.s32.totalorder %s17, 1
    %p291 = scmp.ne.s32.totalorder %s286, %s288
    %p292 = scmp.eq.s32.totalorder %s17, 0
    %p293 = por %p291, %p292
    %p294 = scmp.ne.s32.totalorder %s286, %s288
    %p295 = scmp.eq.s32.totalorder %s22, 1
    %p296 = por %p294, %p295
    %p297 = scmp.ne.s32.totalorder %s288, %s289
    %p298 = scmp.eq.s32.totalorder %s22, 0
    %p299 = por %p297, %p298
    %p300 = scmp.ne.s32.totalorder %s288, %s289
    %p301 = scmp.eq.s32.totalorder %s23, 1
    %p302 = por %p300, %p301
    %p304 = scmp.ne.s32.totalorder %s289, %s303
    %p305 = scmp.eq.s32.totalorder %s23, 0
    %p306 = por %p304, %p305
    %p307 = scmp.le.s32.totalorder 1, %s17
    %p308 = scmp.lt.s32.totalorder %s17, 3
    %p309 = pnand %p307, %p308
    %p310 = pneg %p309
    // Predicated region
    $region9: #{tpu_custom_call.1} parent=5 // pred_check
      _
    $region10: #{tpu_custom_call.1} parent=5 // pred_check_branch
      %312 = sbr.rel (%p309) target = $region12
    $region11: #{tpu_custom_call.1} parent=5 // pred_region
      %s313 = ssub.s32 %s17, 1
      // Predicated region
      $region13: #{tpu_custom_call.1} parent=11 // pred_check
        %p314 = pneg %p168
      $region14: #{tpu_custom_call.1} parent=11 // pred_check_branch
        %316 = sbr.rel (%p314) target = $region16
      $region15: #{tpu_custom_call.1} parent=11 // pred_region
        _
      $region16: #{tpu_custom_call.1} parent=11 // pred_fallthru
        _
      // Predicated region
      $region17: #{tpu_custom_call.1} parent=11 // pred_check
        %p317 = pneg %p215
      $region18: #{tpu_custom_call.1} parent=11 // pred_check_branch
        %319 = sbr.rel (%p317) target = $region20
      $region19: #{tpu_custom_call.1} parent=11 // pred_region
        _
      $region20: #{tpu_custom_call.1} parent=11 // pred_fallthru
        _
      // Predicated region
      $region21: #{tpu_custom_call.1} parent=11 // pred_check
        %p320 = pneg %p236
      $region22: #{tpu_custom_call.1} parent=11 // pred_check_branch
        %322 = sbr.rel (%p320) target = $region24
      $region23: #{tpu_custom_call.1} parent=11 // pred_region
        _
      $region24: #{tpu_custom_call.1} parent=11 // pred_fallthru
        _
      // Predicated region
      $region25: #{tpu_custom_call.1} parent=11 // pred_check
        %p323 = pneg %p257
      $region26: #{tpu_custom_call.1} parent=11 // pred_check_branch
        %325 = sbr.rel (%p323) target = $region28
      $region27: #{tpu_custom_call.1} parent=11 // pred_region
        _
      $region28: #{tpu_custom_call.1} parent=11 // pred_fallthru
        _
      // Predicated region
      $region29: #{tpu_custom_call.1} parent=11 // pred_check
        %p326 = pneg %p278
      $region30: #{tpu_custom_call.1} parent=11 // pred_check_branch
        %328 = sbr.rel (%p326) target = $region32
      $region31: #{tpu_custom_call.1} parent=11 // pred_region
        _
      $region32: #{tpu_custom_call.1} parent=11 // pred_fallthru
        _
    $region12: #{tpu_custom_call.1} parent=5 // pred_fallthru
      _
    %p329 = scmp.lt.s32.totalorder %s17, 2
    // Predicated region
    $region33: #{tpu_custom_call.1} parent=5 // pred_check
      %p330 = pneg %p329
    $region34: #{tpu_custom_call.1} parent=5 // pred_check_branch
      %332 = sbr.rel (%p330) target = $region36
    $region35: #{tpu_custom_call.1} parent=5 // pred_region
      // Predicated region
      $region37: #{tpu_custom_call.1} parent=35 // pred_check
        %p333 = pneg %p37
      $region38: #{tpu_custom_call.1} parent=35 // pred_check_branch
        %335 = sbr.rel (%p333) target = $region40
      $region39: #{tpu_custom_call.1} parent=35 // pred_region
        %p336 = scmp.lt.s32.totalorder %s17, 1
        %s337 = scalar_select %p336, %s17, 1
        %s338 = smul.addr %s337, 16
        %s339 = smul.addr %s338, 4
        %s340 = scalar_lea.vmem %s0, %s339
      $region40: #{tpu_custom_call.1} parent=35 // pred_fallthru
        _
      // Predicated region
      $region41: #{tpu_custom_call.1} parent=35 // pred_check
        %p341 = pneg %p63
      $region42: #{tpu_custom_call.1} parent=35 // pred_check_branch
        %343 = sbr.rel (%p341) target = $region44
      $region43: #{tpu_custom_call.1} parent=35 // pred_region
        %p344 = scmp.lt.s32.totalorder %s17, 1
        %s345 = scalar_select %p344, %s17, 1
        %s346 = smul.addr %s345, 2
        %s347 = scalar_lea.vmem %s1, %s346
      $region44: #{tpu_custom_call.1} parent=35 // pred_fallthru
        _
      // Predicated region
      $region45: #{tpu_custom_call.1} parent=35 // pred_check
        %p348 = pneg %p89
      $region46: #{tpu_custom_call.1} parent=35 // pred_check_branch
        %350 = sbr.rel (%p348) target = $region48
      $region47: #{tpu_custom_call.1} parent=35 // pred_region
        %p351 = scmp.lt.s32.totalorder %s17, 1
        %s352 = scalar_select %p351, %s17, 1
        %s353 = smul.addr %s352, 5
        %s354 = smul.addr %s353, 4
        %s355 = scalar_lea.vmem %s2, %s354
      $region48: #{tpu_custom_call.1} parent=35 // pred_fallthru
        _
      // Predicated region
      $region49: #{tpu_custom_call.1} parent=35 // pred_check
        %p356 = pneg %p115
      $region50: #{tpu_custom_call.1} parent=35 // pred_check_branch
        %358 = sbr.rel (%p356) target = $region52
      $region51: #{tpu_custom_call.1} parent=35 // pred_region
        %p359 = scmp.lt.s32.totalorder %s17, 1
        %s360 = scalar_select %p359, %s17, 1
        %s361 = smul.addr %s360, 5
        %s362 = smul.addr %s361, 4
        %s363 = scalar_lea.vmem %s3, %s362
      $region52: #{tpu_custom_call.1} parent=35 // pred_fallthru
        _
      // Predicated region
      $region53: #{tpu_custom_call.1} parent=35 // pred_check
        %p364 = pneg %p141
      $region54: #{tpu_custom_call.1} parent=35 // pred_check_branch
        %366 = sbr.rel (%p364) target = $region56
      $region55: #{tpu_custom_call.1} parent=35 // pred_region
        %p367 = scmp.lt.s32.totalorder %s17, 1
        %s368 = scalar_select %p367, %s17, 1
        %s369 = scalar_lea.vmem %s4, %s368
      $region56: #{tpu_custom_call.1} parent=35 // pred_fallthru
        _
      // Predicated region
      $region57: #{tpu_custom_call.1} parent=35 // pred_check
        %p370 = pneg %p188
      $region58: #{tpu_custom_call.1} parent=35 // pred_check_branch
        %372 = sbr.rel (%p370) target = $region60
      $region59: #{tpu_custom_call.1} parent=35 // pred_region
        %p373 = scmp.lt.s32.totalorder %s17, 1
        %s374 = scalar_select %p373, %s17, 1
        %s375 = smul.addr %s374, 4
        %s376 = scalar_lea.vmem %s6, %s375
      $region60: #{tpu_custom_call.1} parent=35 // pred_fallthru
        _
    $region36: #{tpu_custom_call.1} parent=5 // pred_fallthru
      _
    %p377 = scmp.le.s32.totalorder 1, %s17
    %p378 = scmp.lt.s32.totalorder %s17, 3
    %p379 = pnand %p377, %p378
    %p380 = pneg %p379
    // Predicated region
    $region61: #{tpu_custom_call.1} parent=5 // pred_check
      _
    $region62: #{tpu_custom_call.1} parent=5 // pred_check_branch
      %382 = sbr.rel (%p379) target = $region64
    $region63: #{tpu_custom_call.1} parent=5 // pred_region
      %s383 = ssub.s32 %s17, 1
      %p384 = scmp.lt.s32.totalorder %s22, 1
      %s385 = scalar_select %p384, %s22, 1
      %s386 = smul.addr %s385, 16
      %s387 = smul.addr %s386, 4
      %s388 = scalar_lea.vmem %s0, %s387
      %p389 = pneg %p43
      %p390 = pneg %p40
      %p391 = scmp.lt.s32.totalorder %s22, 1
      %s392 = scalar_select %p391, %s22, 1
      %s393 = smul.addr %s392, 2
      %s394 = scalar_lea.vmem %s1, %s393
      %p395 = pneg %p69
      %p396 = pneg %p66
      %p397 = scmp.lt.s32.totalorder %s22, 1
      %s398 = scalar_select %p397, %s22, 1
      %s399 = smul.addr %s398, 5
      %s400 = smul.addr %s399, 4
      %s401 = scalar_lea.vmem %s2, %s400
      %p402 = pneg %p95
      %p403 = pneg %p92
      %p404 = scmp.lt.s32.totalorder %s22, 1
      %s405 = scalar_select %p404, %s22, 1
      %s406 = smul.addr %s405, 5
      %s407 = smul.addr %s406, 4
      %s408 = scalar_lea.vmem %s3, %s407
      %p409 = pneg %p121
      %p410 = pneg %p118
      %p411 = scmp.lt.s32.totalorder %s22, 1
      %s412 = scalar_select %p411, %s22, 1
      %s413 = scalar_lea.vmem %s4, %s412
      %p414 = pneg %p147
      %p415 = pneg %p144
      %p416 = pneg %p168
      %p417 = pneg %p165
      %p418 = scmp.lt.s32.totalorder %s22, 1
      %s419 = scalar_select %p418, %s22, 1
      %s420 = smul.addr %s419, 4
      %s421 = scalar_lea.vmem %s6, %s420
      %p422 = pneg %p194
      %p423 = pneg %p191
      %p424 = pneg %p215
      %p425 = pneg %p212
      %p426 = pneg %p236
      %p427 = pneg %p233
      %p428 = pneg %p257
      %p429 = pneg %p254
      %p430 = pneg %p278
      %p431 = pneg %p275
      %p432 = pneg %p299
      %p433 = pneg %p296
      %p434 = scmp.lt.s32.totalorder %s22, 1
      %s435 = scalar_select %p434, %s22, 1
      %s436 = smul.addr %s435, 16
      %s437 = smul.addr %s436, 4
      %s438 = scalar_lea.vmem %s0, %s437
      %p439 = scmp.lt.s32.totalorder %s22, 1
      %s440 = scalar_select %p439, %s22, 1
      %s441 = smul.addr %s440, 2
      %s442 = scalar_lea.vmem %s1, %s441
      %p443 = scmp.lt.s32.totalorder %s22, 1
      %s444 = scalar_select %p443, %s22, 1
      %s445 = smul.addr %s444, 5
      %s446 = smul.addr %s445, 4
      %s447 = scalar_lea.vmem %s2, %s446
      %p448 = scmp.lt.s32.totalorder %s22, 1
      %s449 = scalar_select %p448, %s22, 1
      %s450 = smul.addr %s449, 5
      %s451 = smul.addr %s450, 4
      %s452 = scalar_lea.vmem %s3, %s451
      %p453 = scmp.lt.s32.totalorder %s22, 1
      %s454 = scalar_select %p453, %s22, 1
      %s455 = scalar_lea.vmem %s4, %s454
      %p456 = scmp.lt.s32.totalorder %s22, 1
      %s457 = scalar_select %p456, %s22, 1
      %s458 = smul.addr %s457, 4
      %s459 = scalar_lea.vmem %s6, %s458
      %v461 = vld [vmem:[%s438] sm:$0xf]
      %v462 = vld [vmem:[%s438 + $0x4] sm:$0xf]
      %v463 = vld [vmem:[%s438 + $0x8] sm:$0xf]
      %v464 = vld [vmem:[%s438 + $0xc] sm:$0xf]
      %v465 = vld [vmem:[%s438 + $0x10] sm:$0xf]
      %v466 = vld [vmem:[%s438 + $0x14] sm:$0xf]
      %v467 = vld [vmem:[%s438 + $0x18] sm:$0xf]
      %v468 = vld [vmem:[%s438 + $0x1c] sm:$0xf]
      %v469 = vld [vmem:[%s438 + $0x20] sm:$0xf]
      %v470 = vld [vmem:[%s438 + $0x24] sm:$0xf]
      %v471 = vld [vmem:[%s438 + $0x28] sm:$0xf]
      %v472 = vld [vmem:[%s438 + $0x2c] sm:$0xf]
      %v473 = vld [vmem:[%s438 + $0x30] sm:$0xf]
      %v474 = vld [vmem:[%s438 + $0x34] sm:$0xf]
      %v475 = vld [vmem:[%s438 + $0x38] sm:$0xf]
      %v476 = vld [vmem:[%s438 + $0x3c] sm:$0xf]
      %v477 = vunpack.c.l.bf16 %v461
      %v478 = vunpack.c.l.bf16 %v462
      %v479 = vunpack.c.l.bf16 %v463
      %v480 = vunpack.c.l.bf16 %v464
      %v481 = vunpack.c.l.bf16 %v465
      %v482 = vunpack.c.l.bf16 %v466
      %v483 = vunpack.c.l.bf16 %v467
      %v484 = vunpack.c.l.bf16 %v468
      %v485 = vunpack.c.l.bf16 %v469
      %v486 = vunpack.c.l.bf16 %v470
      %v487 = vunpack.c.l.bf16 %v471
      %v488 = vunpack.c.l.bf16 %v472
      %v489 = vunpack.c.l.bf16 %v473
      %v490 = vunpack.c.l.bf16 %v474
      %v491 = vunpack.c.l.bf16 %v475
      %v492 = vunpack.c.l.bf16 %v476
      %vm493 = vcmask 64512
      %494 = vst.msk [vmem:[#allocation2] sm:$0xff] %vm493, %v477
      %495 = vst.msk [vmem:[#allocation2 + $0x8] sm:$0xff] %vm493, %v478
      %496 = vst.msk [vmem:[#allocation2 + $0x10] sm:$0xff] %vm493, %v479
      %497 = vst.msk [vmem:[#allocation2 + $0x18] sm:$0xff] %vm493, %v480
      %498 = vst.msk [vmem:[#allocation2 + $0x20] sm:$0xff] %vm493, %v481
      %499 = vst.msk [vmem:[#allocation2 + $0x28] sm:$0xff] %vm493, %v482
      %500 = vst.msk [vmem:[#allocation2 + $0x30] sm:$0xff] %vm493, %v483
      %501 = vst.msk [vmem:[#allocation2 + $0x38] sm:$0xff] %vm493, %v484
      %502 = vst.msk [vmem:[#allocation2 + $0x40] sm:$0xff] %vm493, %v485
      %503 = vst.msk [vmem:[#allocation2 + $0x48] sm:$0xff] %vm493, %v486
      %504 = vst.msk [vmem:[#allocation2 + $0x50] sm:$0xff] %vm493, %v487
      %505 = vst.msk [vmem:[#allocation2 + $0x58] sm:$0xff] %vm493, %v488
      %506 = vst.msk [vmem:[#allocation2 + $0x60] sm:$0xff] %vm493, %v489
      %507 = vst.msk [vmem:[#allocation2 + $0x68] sm:$0xff] %vm493, %v490
      %508 = vst.msk [vmem:[#allocation2 + $0x70] sm:$0xff] %vm493, %v491
      %509 = vst.msk [vmem:[#allocation2 + $0x78] sm:$0xff] %vm493, %v492
      %v510 = vld [vmem:[%s442] sm:$0x3]
      %v511 = vunpack.c.l.bf16 %v510
      %v514 = vunpack.c.l.s4 1966171168
      %v515 = vunpack.c.0.s8 %v514
      %v516 = vlaneseq
      %v517 = vshrl.u32 %v516, 7
      %v518 = vsub.s32 %v515, %v517
      %v519 = vrot.slane %v511, %v518
      %v520 = vcombine.high %v519, %v519
      %v522 = vunpack.c.l.s4 1966171168
      %v523 = vunpack.c.0.s8 %v522
      %v524 = vlaneseq
      %v525 = vshrl.u32 %v524, 7
      %v526 = vsub.s32 %v523, %v525
      %v527 = vrot.slane %v519, %v526
      %v529 = vunpack.c.l.s4 1966171168
      %v530 = vunpack.c.0.s8 %v529
      %v531 = vlaneseq
      %v532 = vshrl.u32 %v531, 7
      %v533 = vsub.s32 %v530, %v532
      %v534 = vrot.slane %v520, %v533
      %v535 = vcombine.high %v527, %v527
      %v536 = vcombine.high %v534, %v534
      %v537 = vlaneseq
      %v538 = vshrl.u32 %v537, 7
      %v539 = vsub.s32 0, %v538
      %v540 = vrot.slane %v527, %v539
      %v541 = vlaneseq
      %v542 = vshrl.u32 %v541, 7
      %v543 = vsub.s32 0, %v542
      %v544 = vrot.slane %v534, %v543
      %v545 = vlaneseq
      %v546 = vshrl.u32 %v545, 7
      %v547 = vsub.s32 0, %v546
      %v548 = vrot.slane %v535, %v547
      %v549 = vlaneseq
      %v550 = vshrl.u32 %v549, 7
      %v551 = vsub.s32 0, %v550
      %v552 = vrot.slane %v536, %v551
      %v557 = vpack.c.bf16 %v544, %v540
      %v558 = vpack.c.bf16 %v552, %v548
      %v559 = vld [vmem:[%s447] sm:$0xf]
      %v560 = vld [vmem:[%s447 + $0x4] sm:$0xf]
      %v561 = vld [vmem:[%s447 + $0x8] sm:$0xf]
      %v562 = vld [vmem:[%s447 + $0xc] sm:$0xf]
      %v563 = vld [vmem:[%s447 + $0x10] sm:$0xf]
      %v565 = vsel %vm493, %v557, 0
      %v568 = vsel %vm493, %v558, 0
      %vm570 = vcmask 1043456
      %v572 = vsel %vm570, %v563, 0
      %574 = vmatprep.subr.bf16.mxu0 0
      %575 = vmatpush1.bf16.msra.mxu0 %v572
      %576 = vmatprep.subr.bf16.mxu0 0
      %577 = vmatpush1.bf16.msra.mxu0 0
      %578 = vmatprep.subr.bf16.mxu0 0
      %579 = vmatpush1.bf16.msra.mxu0 0
      %580 = vmatprep.subr.bf16.mxu0 0
      %581 = vmatpush1.bf16.msra.mxu0 0
      %582 = vmatprep.subr.bf16.mxu0 0
      %583 = vmatpush1.bf16.msra.mxu0 0
      %584 = vmatprep.subr.bf16.mxu0 0
      %585 = vmatpush1.bf16.msra.mxu0 0
      %586 = vmatprep.subr.bf16.mxu0 0
      %587 = vmatpush1.bf16.msra.mxu0 0
      %588 = vmatprep.subr.bf16.mxu0 0
      %589 = vmatpush1.bf16.msra.mxu0 0
      %590 = vmatprep.subr.bf16.mxu0 0
      %591 = vmatpush1.bf16.msra.mxu0 0
      %592 = vmatprep.subr.bf16.mxu0 0
      %593 = vmatpush1.bf16.msra.mxu0 0
      %594 = vmatprep.subr.bf16.mxu0 0
      %595 = vmatpush1.bf16.msra.mxu0 0
      %596 = vmatprep.subr.bf16.mxu0 0
      %597 = vmatpush1.bf16.msra.mxu0 0
      %598 = vmatprep.subr.bf16.mxu0 0
      %599 = vmatpush1.bf16.msra.mxu0 0
      %600 = vmatprep.subr.bf16.mxu0 0
      %601 = vmatpush1.bf16.msra.mxu0 0
      %602 = vmatprep.subr.bf16.mxu0 0
      %603 = vmatpush1.bf16.msra.mxu0 0
      %604 = vmatprep.subr.bf16.mxu0 0
      %605 = vmatpush1.bf16.msra.mxu0 0
      %606 = vmatprep.mubr.bf16.mxu0 0
      %607 = vmatmul.mubr.bf16.gmra.mrb[0].mxu0 %v565
      %v608 = vpop.f32.mrb[0].mxu0
      %v609 = vadd.f32 0.0, %v608
      %v610 = vpop.f32.mrb[0].mxu0
      %v611 = vpop.f32.mrb[0].mxu0
      %v612 = vadd.f32 0.0, %v611
      %v613 = vpop.f32.mrb[0].mxu0
      %614 = vmatprep.mubr.bf16.mxu0 0
      %615 = vmatmul.mubr.bf16.gmra.mrb[0].mxu0 %v568
      %v616 = vpop.f32.mrb[0].mxu0
      %v617 = vadd.f32 0.0, %v616
      %v618 = vpop.f32.mrb[0].mxu0
      %v619 = vpop.f32.mrb[0].mxu0
      %v620 = vadd.f32 0.0, %v619
      %v621 = vpop.f32.mrb[0].mxu0
      %622 = vdwg.mxu0
      %v623 = vld [vmem:[#allocation2] ss:$4 sm:$0xff]
      %s624 = scalar_lea.vmem [#allocation2], 32
      %v625 = vld [vmem:[%s624] ss:$4 sm:$0xff]
      %s626 = scalar_lea.vmem [#allocation2], 64
      %v627 = vld [vmem:[%s626] ss:$4 sm:$0xff]
      %s628 = scalar_lea.vmem [#allocation2], 96
      %v629 = vld [vmem:[%s628] ss:$4 sm:$0xff]
      %v630 = vpack.c.bf16 %v625, %v623
      %v631 = vpack.c.bf16 %v629, %v627
      %v632 = vmul.f32 %v540, %v623
      %v633 = vmul.f32 %v544, %v625
      %v634 = vmul.f32 %v548, %v627
      %v635 = vmul.f32 %v552, %v629
      %v636 = vpack.c.bf16 %v633, %v632
      %v637 = vpack.c.bf16 %v635, %v634
      %s638 = scalar_lea.vmem [#allocation2], 1
      %v639 = vld [vmem:[%s638] ss:$4 sm:$0xff]
      %s640 = scalar_lea.vmem [#allocation2], 33
      %v641 = vld [vmem:[%s640] ss:$4 sm:$0xff]
      %s642 = scalar_lea.vmem [#allocation2], 65
      %v643 = vld [vmem:[%s642] ss:$4 sm:$0xff]
      %s644 = scalar_lea.vmem [#allocation2], 97
      %v645 = vld [vmem:[%s644] ss:$4 sm:$0xff]
      %v646 = vpack.c.bf16 %v641, %v639
      %v647 = vpack.c.bf16 %v645, %v643
      %v649 = vsel %vm493, %v646, 0
      %v652 = vsel %vm493, %v647, 0
      %v655 = vsel %vm570, %v560, 0
      %657 = vmatprep.subr.bf16.mxu0 0
      %658 = vmatpush1.bf16.msra.mxu0 %v655
      %659 = vmatprep.subr.bf16.mxu0 0
      %660 = vmatpush1.bf16.msra.mxu0 0
      %661 = vmatprep.subr.bf16.mxu0 0
      %662 = vmatpush1.bf16.msra.mxu0 0
      %663 = vmatprep.subr.bf16.mxu0 0
      %664 = vmatpush1.bf16.msra.mxu0 0
      %665 = vmatprep.subr.bf16.mxu0 0
      %666 = vmatpush1.bf16.msra.mxu0 0
      %667 = vmatprep.subr.bf16.mxu0 0
      %668 = vmatpush1.bf16.msra.mxu0 0
      %669 = vmatprep.subr.bf16.mxu0 0
      %670 = vmatpush1.bf16.msra.mxu0 0
      %671 = vmatprep.subr.bf16.mxu0 0
      %672 = vmatpush1.bf16.msra.mxu0 0
      %673 = vmatprep.subr.bf16.mxu0 0
      %674 = vmatpush1.bf16.msra.mxu0 0
      %675 = vmatprep.subr.bf16.mxu0 0
      %676 = vmatpush1.bf16.msra.mxu0 0
      %677 = vmatprep.subr.bf16.mxu0 0
      %678 = vmatpush1.bf16.msra.mxu0 0
      %679 = vmatprep.subr.bf16.mxu0 0
      %680 = vmatpush1.bf16.msra.mxu0 0
      %681 = vmatprep.subr.bf16.mxu0 0
      %682 = vmatpush1.bf16.msra.mxu0 0
      %683 = vmatprep.subr.bf16.mxu0 0
      %684 = vmatpush1.bf16.msra.mxu0 0
      %685 = vmatprep.subr.bf16.mxu0 0
      %686 = vmatpush1.bf16.msra.mxu0 0
      %687 = vmatprep.subr.bf16.mxu0 0
      %688 = vmatpush1.bf16.msra.mxu0 0
      %689 = vmatprep.mubr.bf16.mxu0 0
      %690 = vmatmul.mubr.bf16.gmra.mrb[0].mxu0 %v649
      %v691 = vpop.f32.mrb[0].mxu0
      %v692 = vadd.f32 0.0, %v691
      %v693 = vpop.f32.mrb[0].mxu0
      %v694 = vpop.f32.mrb[0].mxu0
      %v695 = vadd.f32 0.0, %v694
      %v696 = vpop.f32.mrb[0].mxu0
      %697 = vmatprep.mubr.bf16.mxu0 0
      %698 = vmatmul.mubr.bf16.gmra.mrb[0].mxu0 %v652
      %v699 = vpop.f32.mrb[0].mxu0
      %v700 = vadd.f32 0.0, %v699
      %v701 = vpop.f32.mrb[0].mxu0
      %v702 = vpop.f32.mrb[0].mxu0
      %v703 = vadd.f32 0.0, %v702
      %v704 = vpop.f32.mrb[0].mxu0
      %705 = vdwg.mxu0
      %v707 = vsel %vm493, %v630, 0
      %v710 = vsel %vm493, %v631, 0
      %v713 = vsel %vm570, %v559, 0
      %715 = vmatprep.subr.bf16.mxu0 0
      %716 = vmatpush1.bf16.msra.mxu0 %v713
      %717 = vmatprep.subr.bf16.mxu0 0
      %718 = vmatpush1.bf16.msra.mxu0 0
      %719 = vmatprep.subr.bf16.mxu0 0
      %720 = vmatpush1.bf16.msra.mxu0 0
      %721 = vmatprep.subr.bf16.mxu0 0
      %722 = vmatpush1.bf16.msra.mxu0 0
      %723 = vmatprep.subr.bf16.mxu0 0
      %724 = vmatpush1.bf16.msra.mxu0 0
      %725 = vmatprep.subr.bf16.mxu0 0
      %726 = vmatpush1.bf16.msra.mxu0 0
      %727 = vmatprep.subr.bf16.mxu0 0
      %728 = vmatpush1.bf16.msra.mxu0 0
      %729 = vmatprep.subr.bf16.mxu0 0
      %730 = vmatpush1.bf16.msra.mxu0 0
      %731 = vmatprep.subr.bf16.mxu0 0
      %732 = vmatpush1.bf16.msra.mxu0 0
      %733 = vmatprep.subr.bf16.mxu0 0
      %734 = vmatpush1.bf16.msra.mxu0 0
      %735 = vmatprep.subr.bf16.mxu0 0
      %736 = vmatpush1.bf16.msra.mxu0 0
      %737 = vmatprep.subr.bf16.mxu0 0
      %738 = vmatpush1.bf16.msra.mxu0 0
      %739 = vmatprep.subr.bf16.mxu0 0
      %740 = vmatpush1.bf16.msra.mxu0 0
      %741 = vmatprep.subr.bf16.mxu0 0
      %742 = vmatpush1.bf16.msra.mxu0 0
      %743 = vmatprep.subr.bf16.mxu0 0
      %744 = vmatpush1.bf16.msra.mxu0 0
      %745 = vmatprep.subr.bf16.mxu0 0
      %746 = vmatpush1.bf16.msra.mxu0 0
      %747 = vmatprep.mubr.bf16.mxu0 0
      %748 = vmatmul.mubr.bf16.gmra.mrb[0].mxu0 %v707
      %v749 = vpop.f32.mrb[0].mxu0
      %v750 = vadd.f32 %v692, %v749
      %v751 = vpop.f32.mrb[0].mxu0
      %v752 = vpop.f32.mrb[0].mxu0
      %v753 = vadd.f32 %v695, %v752
      %v754 = vpop.f32.mrb[0].mxu0
      %755 = vmatprep.mubr.bf16.mxu0 0
      %756 = vmatmul.mubr.bf16.gmra.mrb[0].mxu0 %v710
      %v757 = vpop.f32.mrb[0].mxu0
      %v758 = vadd.f32 %v700, %v757
      %v759 = vpop.f32.mrb[0].mxu0
      %v760 = vpop.f32.mrb[0].mxu0
      %v761 = vadd.f32 %v703, %v760
      %v762 = vpop.f32.mrb[0].mxu0
      %763 = vdwg.mxu0
      %v764 = vmul.f32 %v540, %v639
      %v765 = vmul.f32 %v544, %v641
      %v766 = vmul.f32 %v548, %v643
      %v767 = vmul.f32 %v552, %v645
      %v768 = vpack.c.bf16 %v765, %v764
      %v769 = vpack.c.bf16 %v767, %v766
      %v771 = vsel %vm493, %v768, 0
      %v774 = vsel %vm493, %v769, 0
      %776 = vmatprep.subr.bf16.mxu0 0
      %777 = vmatpush1.bf16.msra.mxu0 %v655
      %778 = vmatprep.subr.bf16.mxu0 0
      %779 = vmatpush1.bf16.msra.mxu0 0
      %780 = vmatprep.subr.bf16.mxu0 0
      %781 = vmatpush1.bf16.msra.mxu0 0
      %782 = vmatprep.subr.bf16.mxu0 0
      %783 = vmatpush1.bf16.msra.mxu0 0
      %784 = vmatprep.subr.bf16.mxu0 0
      %785 = vmatpush1.bf16.msra.mxu0 0
      %786 = vmatprep.subr.bf16.mxu0 0
      %787 = vmatpush1.bf16.msra.mxu0 0
      %788 = vmatprep.subr.bf16.mxu0 0
      %789 = vmatpush1.bf16.msra.mxu0 0
      %790 = vmatprep.subr.bf16.mxu0 0
      %791 = vmatpush1.bf16.msra.mxu0 0
      %792 = vmatprep.subr.bf16.mxu0 0
      %793 = vmatpush1.bf16.msra.mxu0 0
      %794 = vmatprep.subr.bf16.mxu0 0
      %795 = vmatpush1.bf16.msra.mxu0 0
      %796 = vmatprep.subr.bf16.mxu0 0
      %797 = vmatpush1.bf16.msra.mxu0 0
      %798 = vmatprep.subr.bf16.mxu0 0
      %799 = vmatpush1.bf16.msra.mxu0 0
      %800 = vmatprep.subr.bf16.mxu0 0
      %801 = vmatpush1.bf16.msra.mxu0 0
      %802 = vmatprep.subr.bf16.mxu0 0
      %803 = vmatpush1.bf16.msra.mxu0 0
      %804 = vmatprep.subr.bf16.mxu0 0
      %805 = vmatpush1.bf16.msra.mxu0 0
      %806 = vmatprep.subr.bf16.mxu0 0
      %807 = vmatpush1.bf16.msra.mxu0 0
      %808 = vmatprep.mubr.bf16.mxu0 0
      %809 = vmatmul.mubr.bf16.gmra.mrb[0].mxu0 %v771
      %v810 = vpop.f32.mrb[0].mxu0
      %v811 = vadd.f32 0.0, %v810
      %v812 = vpop.f32.mrb[0].mxu0
      %v813 = vpop.f32.mrb[0].mxu0
      %v814 = vadd.f32 0.0, %v813
      %v815 = vpop.f32.mrb[0].mxu0
      %816 = vmatprep.mubr.bf16.mxu0 0
      %817 = vmatmul.mubr.bf16.gmra.mrb[0].mxu0 %v774
      %v818 = vpop.f32.mrb[0].mxu0
      %v819 = vadd.f32 0.0, %v818
      %v820 = vpop.f32.mrb[0].mxu0
      %v821 = vpop.f32.mrb[0].mxu0
      %v822 = vadd.f32 0.0, %v821
      %v823 = vpop.f32.mrb[0].mxu0
      %824 = vdwg.mxu0
      %v826 = vsel %vm493, %v636, 0
      %v829 = vsel %vm493, %v637, 0
      %831 = vmatprep.subr.bf16.mxu0 0
      %832 = vmatpush1.bf16.msra.mxu0 %v713
      %833 = vmatprep.subr.bf16.mxu0 0
      %834 = vmatpush1.bf16.msra.mxu0 0
      %835 = vmatprep.subr.bf16.mxu0 0
      %836 = vmatpush1.bf16.msra.mxu0 0
      %837 = vmatprep.subr.bf16.mxu0 0
      %838 = vmatpush1.bf16.msra.mxu0 0
      %839 = vmatprep.subr.bf16.mxu0 0
      %840 = vmatpush1.bf16.msra.mxu0 0
      %841 = vmatprep.subr.bf16.mxu0 0
      %842 = vmatpush1.bf16.msra.mxu0 0
      %843 = vmatprep.subr.bf16.mxu0 0
      %844 = vmatpush1.bf16.msra.mxu0 0
      %845 = vmatprep.subr.bf16.mxu0 0
      %846 = vmatpush1.bf16.msra.mxu0 0
      %847 = vmatprep.subr.bf16.mxu0 0
      %848 = vmatpush1.bf16.msra.mxu0 0
      %849 = vmatprep.subr.bf16.mxu0 0
      %850 = vmatpush1.bf16.msra.mxu0 0
      %851 = vmatprep.subr.bf16.mxu0 0
      %852 = vmatpush1.bf16.msra.mxu0 0
      %853 = vmatprep.subr.bf16.mxu0 0
      %854 = vmatpush1.bf16.msra.mxu0 0
      %855 = vmatprep.subr.bf16.mxu0 0
      %856 = vmatpush1.bf16.msra.mxu0 0
      %857 = vmatprep.subr.bf16.mxu0 0
      %858 = vmatpush1.bf16.msra.mxu0 0
      %859 = vmatprep.subr.bf16.mxu0 0
      %860 = vmatpush1.bf16.msra.mxu0 0
      %861 = vmatprep.subr.bf16.mxu0 0
      %862 = vmatpush1.bf16.msra.mxu0 0
      %863 = vmatprep.mubr.bf16.mxu0 0
      %864 = vmatmul.mubr.bf16.gmra.mrb[0].mxu0 %v826
      %v865 = vpop.f32.mrb[0].mxu0
      %v866 = vadd.f32 %v811, %v865
      %v867 = vpop.f32.mrb[0].mxu0
      %v868 = vpop.f32.mrb[0].mxu0
      %v869 = vadd.f32 %v814, %v868
      %v870 = vpop.f32.mrb[0].mxu0
      %871 = vmatprep.mubr.bf16.mxu0 0
      %872 = vmatmul.mubr.bf16.gmra.mrb[0].mxu0 %v829
      %v873 = vpop.f32.mrb[0].mxu0
      %v874 = vadd.f32 %v819, %v873
      %v875 = vpop.f32.mrb[0].mxu0
      %v876 = vpop.f32.mrb[0].mxu0
      %v877 = vadd.f32 %v822, %v876
      %v878 = vpop.f32.mrb[0].mxu0
      %879 = vdwg.mxu0
      %s880 = scalar_lea.vmem [#allocation2], 2
      %v881 = vld [vmem:[%s880] ss:$4 sm:$0xff]
      %s882 = scalar_lea.vmem [#allocation2], 34
      %v883 = vld [vmem:[%s882] ss:$4 sm:$0xff]
      %s884 = scalar_lea.vmem [#allocation2], 66
      %v885 = vld [vmem:[%s884] ss:$4 sm:$0xff]
      %s886 = scalar_lea.vmem [#allocation2], 98
      %v887 = vld [vmem:[%s886] ss:$4 sm:$0xff]
      %v888 = vpack.c.bf16 %v883, %v881
      %v889 = vpack.c.bf16 %v887, %v885
      %v891 = vsel %vm493, %v888, 0
      %v894 = vsel %vm493, %v889, 0
      %v897 = vsel %vm570, %v561, 0
      %899 = vmatprep.subr.bf16.mxu0 0
      %900 = vmatpush1.bf16.msra.mxu0 %v897
      %901 = vmatprep.subr.bf16.mxu0 0
      %902 = vmatpush1.bf16.msra.mxu0 0
      %903 = vmatprep.subr.bf16.mxu0 0
      %904 = vmatpush1.bf16.msra.mxu0 0
      %905 = vmatprep.subr.bf16.mxu0 0
      %906 = vmatpush1.bf16.msra.mxu0 0
      %907 = vmatprep.subr.bf16.mxu0 0
      %908 = vmatpush1.bf16.msra.mxu0 0
      %909 = vmatprep.subr.bf16.mxu0 0
      %910 = vmatpush1.bf16.msra.mxu0 0
      %911 = vmatprep.subr.bf16.mxu0 0
      %912 = vmatpush1.bf16.msra.mxu0 0
      %913 = vmatprep.subr.bf16.mxu0 0
      %914 = vmatpush1.bf16.msra.mxu0 0
      %915 = vmatprep.subr.bf16.mxu0 0
      %916 = vmatpush1.bf16.msra.mxu0 0
      %917 = vmatprep.subr.bf16.mxu0 0
      %918 = vmatpush1.bf16.msra.mxu0 0
      %919 = vmatprep.subr.bf16.mxu0 0
      %920 = vmatpush1.bf16.msra.mxu0 0
      %921 = vmatprep.subr.bf16.mxu0 0
      %922 = vmatpush1.bf16.msra.mxu0 0
      %923 = vmatprep.subr.bf16.mxu0 0
      %924 = vmatpush1.bf16.msra.mxu0 0
      %925 = vmatprep.subr.bf16.mxu0 0
      %926 = vmatpush1.bf16.msra.mxu0 0
      %927 = vmatprep.subr.bf16.mxu0 0
      %928 = vmatpush1.bf16.msra.mxu0 0
      %929 = vmatprep.subr.bf16.mxu0 0
      %930 = vmatpush1.bf16.msra.mxu0 0
      %931 = vmatprep.mubr.bf16.mxu0 0
      %932 = vmatmul.mubr.bf16.gmra.mrb[0].mxu0 %v891
      %v933 = vpop.f32.mrb[0].mxu0
      %v934 = vadd.f32 0.0, %v933
      %v935 = vpop.f32.mrb[0].mxu0
      %v936 = vpop.f32.mrb[0].mxu0
      %v937 = vadd.f32 0.0, %v936
      %v938 = vpop.f32.mrb[0].mxu0
      %939 = vmatprep.mubr.bf16.mxu0 0
      %940 = vmatmul.mubr.bf16.gmra.mrb[0].mxu0 %v894
      %v941 = vpop.f32.mrb[0].mxu0
      %v942 = vadd.f32 0.0, %v941
      %v943 = vpop.f32.mrb[0].mxu0
      %v944 = vpop.f32.mrb[0].mxu0
      %v945 = vadd.f32 0.0, %v944
      %v946 = vpop.f32.mrb[0].mxu0
      %947 = vdwg.mxu0
      %v948 = vadd.f32 %v750, %v934
      %v949 = vadd.f32 %v753, %v937
      %v950 = vadd.f32 %v758, %v942
      %v951 = vadd.f32 %v761, %v945
      %v952 = vmul.f32 %v540, %v881
      %v953 = vmul.f32 %v544, %v883
      %v954 = vmul.f32 %v548, %v885
      %v955 = vmul.f32 %v552, %v887
      %v956 = vpack.c.bf16 %v953, %v952
      %v957 = vpack.c.bf16 %v955, %v954
      %v959 = vsel %vm493, %v956, 0
      %v962 = vsel %vm493, %v957, 0
      %964 = vmatprep.subr.bf16.mxu0 0
      %965 = vmatpush1.bf16.msra.mxu0 %v897
      %966 = vmatprep.subr.bf16.mxu0 0
      %967 = vmatpush1.bf16.msra.mxu0 0
      %968 = vmatprep.subr.bf16.mxu0 0
      %969 = vmatpush1.bf16.msra.mxu0 0
      %970 = vmatprep.subr.bf16.mxu0 0
      %971 = vmatpush1.bf16.msra.mxu0 0
      %972 = vmatprep.subr.bf16.mxu0 0
      %973 = vmatpush1.bf16.msra.mxu0 0
      %974 = vmatprep.subr.bf16.mxu0 0
      %975 = vmatpush1.bf16.msra.mxu0 0
      %976 = vmatprep.subr.bf16.mxu0 0
      %977 = vmatpush1.bf16.msra.mxu0 0
      %978 = vmatprep.subr.bf16.mxu0 0
      %979 = vmatpush1.bf16.msra.mxu0 0
      %980 = vmatprep.subr.bf16.mxu0 0
      %981 = vmatpush1.bf16.msra.mxu0 0
      %982 = vmatprep.subr.bf16.mxu0 0
      %983 = vmatpush1.bf16.msra.mxu0 0
      %984 = vmatprep.subr.bf16.mxu0 0
      %985 = vmatpush1.bf16.msra.mxu0 0
      %986 = vmatprep.subr.bf16.mxu0 0
      %987 = vmatpush1.bf16.msra.mxu0 0
      %988 = vmatprep.subr.bf16.mxu0 0
      %989 = vmatpush1.bf16.msra.mxu0 0
      %990 = vmatprep.subr.bf16.mxu0 0
      %991 = vmatpush1.bf16.msra.mxu0 0
      %992 = vmatprep.subr.bf16.mxu0 0
      %993 = vmatpush1.bf16.msra.mxu0 0
      %994 = vmatprep.subr.bf16.mxu0 0
      %995 = vmatpush1.bf16.msra.mxu0 0
      %996 = vmatprep.mubr.bf16.mxu0 0
      %997 = vmatmul.mubr.bf16.gmra.mrb[0].mxu0 %v959
      %v998 = vpop.f32.mrb[0].mxu0
      %v999 = vadd.f32 0.0, %v998
      %v1000 = vpop.f32.mrb[0].mxu0
      %v1001 = vpop.f32.mrb[0].mxu0
      %v1002 = vadd.f32 0.0, %v1001
      %v1003 = vpop.f32.mrb[0].mxu0
      %1004 = vmatprep.mubr.bf16.mxu0 0
      %1005 = vmatmul.mubr.bf16.gmra.mrb[0].mxu0 %v962
      %v1006 = vpop.f32.mrb[0].mxu0
      %v1007 = vadd.f32 0.0, %v1006
      %v1008 = vpop.f32.mrb[0].mxu0
      %v1009 = vpop.f32.mrb[0].mxu0
      %v1010 = vadd.f32 0.0, %v1009
      %v1011 = vpop.f32.mrb[0].mxu0
      %1012 = vdwg.mxu0
      %v1013 = vadd.f32 %v866, %v999
      %v1014 = vadd.f32 %v869, %v1002
      %v1015 = vadd.f32 %v874, %v1007
      %v1016 = vadd.f32 %v877, %v1010
      %s1017 = scalar_lea.vmem [#allocation2], 3
      %v1018 = vld [vmem:[%s1017] ss:$4 sm:$0xff]
      %s1019 = scalar_lea.vmem [#allocation2], 35
      %v1020 = vld [vmem:[%s1019] ss:$4 sm:$0xff]
      %s1021 = scalar_lea.vmem [#allocation2], 67
      %v1022 = vld [vmem:[%s1021] ss:$4 sm:$0xff]
      %s1023 = scalar_lea.vmem [#allocation2], 99
      %v1024 = vld [vmem:[%s1023] ss:$4 sm:$0xff]
      %v1025 = vpack.c.bf16 %v1020, %v1018
      %v1026 = vpack.c.bf16 %v1024, %v1022
      %v1028 = vsel %vm493, %v1025, 0
      %v1031 = vsel %vm493, %v1026, 0
      %v1034 = vsel %vm570, %v562, 0
      %1036 = vmatprep.subr.bf16.mxu0 0
      %1037 = vmatpush1.bf16.msra.mxu0 %v1034
      %1038 = vmatprep.subr.bf16.mxu0 0
      %1039 = vmatpush1.bf16.msra.mxu0 0
      %1040 = vmatprep.subr.bf16.mxu0 0
      %1041 = vmatpush1.bf16.msra.mxu0 0
      %1042 = vmatprep.subr.bf16.mxu0 0
      %1043 = vmatpush1.bf16.msra.mxu0 0
      %1044 = vmatprep.subr.bf16.mxu0 0
      %1045 = vmatpush1.bf16.msra.mxu0 0
      %1046 = vmatprep.subr.bf16.mxu0 0
      %1047 = vmatpush1.bf16.msra.mxu0 0
      %1048 = vmatprep.subr.bf16.mxu0 0
      %1049 = vmatpush1.bf16.msra.mxu0 0
      %1050 = vmatprep.subr.bf16.mxu0 0
      %1051 = vmatpush1.bf16.msra.mxu0 0
      %1052 = vmatprep.subr.bf16.mxu0 0
      %1053 = vmatpush1.bf16.msra.mxu0 0
      %1054 = vmatprep.subr.bf16.mxu0 0
      %1055 = vmatpush1.bf16.msra.mxu0 0
      %1056 = vmatprep.subr.bf16.mxu0 0
      %1057 = vmatpush1.bf16.msra.mxu0 0
      %1058 = vmatprep.subr.bf16.mxu0 0
      %1059 = vmatpush1.bf16.msra.mxu0 0
      %1060 = vmatprep.subr.bf16.mxu0 0
      %1061 = vmatpush1.bf16.msra.mxu0 0
      %1062 = vmatprep.subr.bf16.mxu0 0
      %1063 = vmatpush1.bf16.msra.mxu0 0
      %1064 = vmatprep.subr.bf16.mxu0 0
      %1065 = vmatpush1.bf16.msra.mxu0 0
      %1066 = vmatprep.subr.bf16.mxu0 0
      %1067 = vmatpush1.bf16.msra.mxu0 0
      %1068 = vmatprep.mubr.bf16.mxu0 0
      %1069 = vmatmul.mubr.bf16.gmra.mrb[0].mxu0 %v1028
      %v1070 = vpop.f32.mrb[0].mxu0
      %v1071 = vadd.f32 0.0, %v1070
      %v1072 = vpop.f32.mrb[0].mxu0
      %v1073 = vpop.f32.mrb[0].mxu0
      %v1074 = vadd.f32 0.0, %v1073
      %v1075 = vpop.f32.mrb[0].mxu0
      %1076 = vmatprep.mubr.bf16.mxu0 0
      %1077 = vmatmul.mubr.bf16.gmra.mrb[0].mxu0 %v1031
      %v1078 = vpop.f32.mrb[0].mxu0
      %v1079 = vadd.f32 0.0, %v1078
      %v1080 = vpop.f32.mrb[0].mxu0
      %v1081 = vpop.f32.mrb[0].mxu0
      %v1082 = vadd.f32 0.0, %v1081
      %v1083 = vpop.f32.mrb[0].mxu0
      %1084 = vdwg.mxu0
      %v1085 = vadd.f32 %v948, %v1071
      %v1086 = vadd.f32 %v949, %v1074
      %v1087 = vadd.f32 %v950, %v1079
      %v1088 = vadd.f32 %v951, %v1082
      %v1089 = vmul.f32 %v540, %v1018
      %v1090 = vmul.f32 %v544, %v1020
      %v1091 = vmul.f32 %v548, %v1022
      %v1092 = vmul.f32 %v552, %v1024
      %v1093 = vpack.c.bf16 %v1090, %v1089
      %v1094 = vpack.c.bf16 %v1092, %v1091
      %v1096 = vsel %vm493, %v1093, 0
      %v1099 = vsel %vm493, %v1094, 0
      %1101 = vmatprep.subr.bf16.mxu0 0
      %1102 = vmatpush1.bf16.msra.mxu0 %v1034
      %1103 = vmatprep.subr.bf16.mxu0 0
      %1104 = vmatpush1.bf16.msra.mxu0 0
      %1105 = vmatprep.subr.bf16.mxu0 0
      %1106 = vmatpush1.bf16.msra.mxu0 0
      %1107 = vmatprep.subr.bf16.mxu0 0
      %1108 = vmatpush1.bf16.msra.mxu0 0
      %1109 = vmatprep.subr.bf16.mxu0 0
      %1110 = vmatpush1.bf16.msra.mxu0 0
      %1111 = vmatprep.subr.bf16.mxu0 0
      %1112 = vmatpush1.bf16.msra.mxu0 0
      %1113 = vmatprep.subr.bf16.mxu0 0
      %1114 = vmatpush1.bf16.msra.mxu0 0
      %1115 = vmatprep.subr.bf16.mxu0 0
      %1116 = vmatpush1.bf16.msra.mxu0 0
      %1117 = vmatprep.subr.bf16.mxu0 0
      %1118 = vmatpush1.bf16.msra.mxu0 0
      %1119 = vmatprep.subr.bf16.mxu0 0
      %1120 = vmatpush1.bf16.msra.mxu0 0
      %1121 = vmatprep.subr.bf16.mxu0 0
      %1122 = vmatpush1.bf16.msra.mxu0 0
      %1123 = vmatprep.subr.bf16.mxu0 0
      %1124 = vmatpush1.bf16.msra.mxu0 0
      %1125 = vmatprep.subr.bf16.mxu0 0
      %1126 = vmatpush1.bf16.msra.mxu0 0
      %1127 = vmatprep.subr.bf16.mxu0 0
      %1128 = vmatpush1.bf16.msra.mxu0 0
      %1129 = vmatprep.subr.bf16.mxu0 0
      %1130 = vmatpush1.bf16.msra.mxu0 0
      %1131 = vmatprep.subr.bf16.mxu0 0
      %1132 = vmatpush1.bf16.msra.mxu0 0
      %1133 = vmatprep.mubr.bf16.mxu0 0
      %1134 = vmatmul.mubr.bf16.gmra.mrb[0].mxu0 %v1096
      %v1135 = vpop.f32.mrb[0].mxu0
      %v1136 = vadd.f32 0.0, %v1135
      %v1137 = vpop.f32.mrb[0].mxu0
      %v1138 = vpop.f32.mrb[0].mxu0
      %v1139 = vadd.f32 0.0, %v1138
      %v1140 = vpop.f32.mrb[0].mxu0
      %1141 = vmatprep.mubr.bf16.mxu0 0
      %1142 = vmatmul.mubr.bf16.gmra.mrb[0].mxu0 %v1099
      %v1143 = vpop.f32.mrb[0].mxu0
      %v1144 = vadd.f32 0.0, %v1143
      %v1145 = vpop.f32.mrb[0].mxu0
      %v1146 = vpop.f32.mrb[0].mxu0
      %v1147 = vadd.f32 0.0, %v1146
      %v1148 = vpop.f32.mrb[0].mxu0
      %1149 = vdwg.mxu0
      %v1150 = vadd.f32 %v1013, %v1136
      %v1151 = vadd.f32 %v1014, %v1139
      %v1152 = vadd.f32 %v1015, %v1144
      %v1153 = vadd.f32 %v1016, %v1147
      %v1154 = vsub.f32 %v609, %v1085
      %v1155 = vsub.f32 %v612, %v1086
      %v1156 = vsub.f32 %v617, %v1087
      %v1157 = vsub.f32 %v620, %v1088
      %v1158 = vld [vmem:[%s455] sm:$0x1]
      %v1160 = vlaneseq
      %v1161 = vshrl.u32 %v1160, 7
      %v1162 = vsub.s32 0, %v1161
      %v1163 = vrot.slane %v1158, %v1162
      %v1165 = vadd.f32 %v609, %v1163
      %v1166 = vadd.f32 %v612, %v1163
      %v1167 = vadd.f32 %v617, %v1163
      %v1168 = vadd.f32 %v620, %v1163
      %v1169 = vadd.f32 %v1085, %v1163
      %v1170 = vadd.f32 %v1086, %v1163
      %v1171 = vadd.f32 %v1087, %v1163
      %v1172 = vadd.f32 %v1088, %v1163
      %v1173 = vadd.f32 %v1154, %v1163
      %v1174 = vadd.f32 %v1155, %v1163
      %v1175 = vadd.f32 %v1156, %v1163
      %v1176 = vadd.f32 %v1157, %v1163
      %v1177 = vadd.f32 %v1150, %v1163
      %v1178 = vadd.f32 %v1151, %v1163
      %v1179 = vadd.f32 %v1152, %v1163
      %v1180 = vadd.f32 %v1153, %v1163
      %vm1181 = vcmask 293888
      %v1182 = vsel %vm1181, %v1165, 0.0
      %v1183 = vsel %vm1181, %v1166, 0.0
      %v1184 = vadd.f32 %v1182, %v1183
      %v1185 = vsel %vm1181, %v1167, 0.0
      %v1186 = vadd.f32 %v1184, %v1185
      %v1187 = vsel %vm1181, %v1168, 0.0
      %v1188 = vadd.f32 %v1186, %v1187
      %v1189 = vsel %vm1181, %v1169, 0.0
      %v1190 = vadd.f32 %v1188, %v1189
      %v1191 = vsel %vm1181, %v1170, 0.0
      %v1192 = vadd.f32 %v1190, %v1191
      %v1193 = vsel %vm1181, %v1171, 0.0
      %v1194 = vadd.f32 %v1192, %v1193
      %v1195 = vsel %vm1181, %v1172, 0.0
      %v1196 = vadd.f32 %v1194, %v1195
      %v1197 = vsel %vm1181, %v1173, 0.0
      %v1198 = vadd.f32 %v1196, %v1197
      %v1199 = vsel %vm1181, %v1174, 0.0
      %v1200 = vadd.f32 %v1198, %v1199
      %v1201 = vsel %vm1181, %v1175, 0.0
      %v1202 = vadd.f32 %v1200, %v1201
      %v1203 = vsel %vm1181, %v1176, 0.0
      %v1204 = vadd.f32 %v1202, %v1203
      %v1205 = vsel %vm1181, %v1177, 0.0
      %v1206 = vadd.f32 %v1204, %v1205
      %v1207 = vsel %vm1181, %v1178, 0.0
      %v1208 = vadd.f32 %v1206, %v1207
      %v1209 = vsel %vm1181, %v1179, 0.0
      %v1210 = vadd.f32 %v1208, %v1209
      %v1211 = vsel %vm1181, %v1180, 0.0
      %v1212 = vadd.f32 %v1210, %v1211
      %v1213 = vrot.slane %v1212, 4
      %v1214 = vadd.f32 %v1212, %v1213
      %v1215 = vrot.slane %v1214, 2
      %v1216 = vadd.f32 %v1214, %v1215
      %v1217 = vrot.slane %v1216, 1
      %v1218 = vadd.f32 %v1216, %v1217
      %v1219 = vrcp.pop 128.0
      %v1220 = vmul.f32 %v1218, %v1219
      %v1221 = vsub.f32 %v1165, %v1220
      %v1222 = vsub.f32 %v1166, %v1220
      %v1223 = vsub.f32 %v1167, %v1220
      %v1224 = vsub.f32 %v1168, %v1220
      %v1225 = vsub.f32 %v1169, %v1220
      %v1226 = vsub.f32 %v1170, %v1220
      %v1227 = vsub.f32 %v1171, %v1220
      %v1228 = vsub.f32 %v1172, %v1220
      %v1229 = vsub.f32 %v1173, %v1220
      %v1230 = vsub.f32 %v1174, %v1220
      %v1231 = vsub.f32 %v1175, %v1220
      %v1232 = vsub.f32 %v1176, %v1220
      %v1233 = vsub.f32 %v1177, %v1220
      %v1234 = vsub.f32 %v1178, %v1220
      %v1235 = vsub.f32 %v1179, %v1220
      %v1236 = vsub.f32 %v1180, %v1220
      %v1237 = vmul.f32 %v1221, %v1221
      %v1238 = vmul.f32 %v1222, %v1222
      %v1239 = vmul.f32 %v1223, %v1223
      %v1240 = vmul.f32 %v1224, %v1224
      %v1241 = vmul.f32 %v1225, %v1225
      %v1242 = vmul.f32 %v1226, %v1226
      %v1243 = vmul.f32 %v1227, %v1227
      %v1244 = vmul.f32 %v1228, %v1228
      %v1245 = vmul.f32 %v1229, %v1229
      %v1246 = vmul.f32 %v1230, %v1230
      %v1247 = vmul.f32 %v1231, %v1231
      %v1248 = vmul.f32 %v1232, %v1232
      %v1249 = vmul.f32 %v1233, %v1233
      %v1250 = vmul.f32 %v1234, %v1234
      %v1251 = vmul.f32 %v1235, %v1235
      %v1252 = vmul.f32 %v1236, %v1236
      %v1253 = vsel %vm1181, %v1237, 0.0
      %v1254 = vsel %vm1181, %v1238, 0.0
      %v1255 = vadd.f32 %v1253, %v1254
      %v1256 = vsel %vm1181, %v1239, 0.0
      %v1257 = vadd.f32 %v1255, %v1256
      %v1258 = vsel %vm1181, %v1240, 0.0
      %v1259 = vadd.f32 %v1257, %v1258
      %v1260 = vsel %vm1181, %v1241, 0.0
      %v1261 = vadd.f32 %v1259, %v1260
      %v1262 = vsel %vm1181, %v1242, 0.0
      %v1263 = vadd.f32 %v1261, %v1262
      %v1264 = vsel %vm1181, %v1243, 0.0
      %v1265 = vadd.f32 %v1263, %v1264
      %v1266 = vsel %vm1181, %v1244, 0.0
      %v1267 = vadd.f32 %v1265, %v1266
      %v1268 = vsel %vm1181, %v1245, 0.0
      %v1269 = vadd.f32 %v1267, %v1268
      %v1270 = vsel %vm1181, %v1246, 0.0
      %v1271 = vadd.f32 %v1269, %v1270
      %v1272 = vsel %vm1181, %v1247, 0.0
      %v1273 = vadd.f32 %v1271, %v1272
      %v1274 = vsel %vm1181, %v1248, 0.0
      %v1275 = vadd.f32 %v1273, %v1274
      %v1276 = vsel %vm1181, %v1249, 0.0
      %v1277 = vadd.f32 %v1275, %v1276
      %v1278 = vsel %vm1181, %v1250, 0.0
      %v1279 = vadd.f32 %v1277, %v1278
      %v1280 = vsel %vm1181, %v1251, 0.0
      %v1281 = vadd.f32 %v1279, %v1280
      %v1282 = vsel %vm1181, %v1252, 0.0
      %v1283 = vadd.f32 %v1281, %v1282
      %v1284 = vrot.slane %v1283, 4
      %v1285 = vadd.f32 %v1283, %v1284
      %v1286 = vrot.slane %v1285, 2
      %v1287 = vadd.f32 %v1285, %v1286
      %v1288 = vrot.slane %v1287, 1
      %v1289 = vadd.f32 %v1287, %v1288
      %v1290 = vmul.f32 %v1289, %v1219
      %v1291 = vadd.f32 %v1290, 1e-08
      %v1292 = vrsqrt.pop %v1291
      %v1293 = vmul.f32 %v1221, %v1292
      %v1294 = vmul.f32 %v1222, %v1292
      %v1295 = vmul.f32 %v1223, %v1292
      %v1296 = vmul.f32 %v1224, %v1292
      %v1297 = vmul.f32 %v1225, %v1292
      %v1298 = vmul.f32 %v1226, %v1292
      %v1299 = vmul.f32 %v1227, %v1292
      %v1300 = vmul.f32 %v1228, %v1292
      %v1301 = vmul.f32 %v1229, %v1292
      %v1302 = vmul.f32 %v1230, %v1292
      %v1303 = vmul.f32 %v1231, %v1292
      %v1304 = vmul.f32 %v1232, %v1292
      %v1305 = vmul.f32 %v1233, %v1292
      %v1306 = vmul.f32 %v1234, %v1292
      %v1307 = vmul.f32 %v1235, %v1292
      %v1308 = vmul.f32 %v1236, %v1292
      %v1309 = vxor.u32 %v1293, 2147483648
      %v1310 = vxor.u32 %v1294, 2147483648
      %v1311 = vxor.u32 %v1295, 2147483648
      %v1312 = vxor.u32 %v1296, 2147483648
      %v1313 = vxor.u32 %v1297, 2147483648
      %v1314 = vxor.u32 %v1298, 2147483648
      %v1315 = vxor.u32 %v1299, 2147483648
      %v1316 = vxor.u32 %v1300, 2147483648
      %v1317 = vxor.u32 %v1301, 2147483648
      %v1318 = vxor.u32 %v1302, 2147483648
      %v1319 = vxor.u32 %v1303, 2147483648
      %v1320 = vxor.u32 %v1304, 2147483648
      %v1321 = vxor.u32 %v1305, 2147483648
      %v1322 = vxor.u32 %v1306, 2147483648
      %v1323 = vxor.u32 %v1307, 2147483648
      %v1324 = vxor.u32 %v1308, 2147483648
      %v1325 = vmul.f32 %v1309, 1.442695
      %v1326 = vpow.pop %v1325
      %v1327 = vmul.f32 %v1310, 1.442695
      %v1328 = vpow.pop %v1327
      %v1329 = vmul.f32 %v1311, 1.442695
      %v1330 = vpow.pop %v1329
      %v1331 = vmul.f32 %v1312, 1.442695
      %v1332 = vpow.pop %v1331
      %v1333 = vmul.f32 %v1313, 1.442695
      %v1334 = vpow.pop %v1333
      %v1335 = vmul.f32 %v1314, 1.442695
      %v1336 = vpow.pop %v1335
      %v1337 = vmul.f32 %v1315, 1.442695
      %v1338 = vpow.pop %v1337
      %v1339 = vmul.f32 %v1316, 1.442695
      %v1340 = vpow.pop %v1339
      %v1341 = vmul.f32 %v1317, 1.442695
      %v1342 = vpow.pop %v1341
      %v1343 = vmul.f32 %v1318, 1.442695
      %v1344 = vpow.pop %v1343
      %v1345 = vmul.f32 %v1319, 1.442695
      %v1346 = vpow.pop %v1345
      %v1347 = vmul.f32 %v1320, 1.442695
      %v1348 = vpow.pop %v1347
      %v1349 = vmul.f32 %v1321, 1.442695
      %v1350 = vpow.pop %v1349
      %v1351 = vmul.f32 %v1322, 1.442695
      %v1352 = vpow.pop %v1351
      %v1353 = vmul.f32 %v1323, 1.442695
      %v1354 = vpow.pop %v1353
      %v1355 = vmul.f32 %v1324, 1.442695
      %v1356 = vpow.pop %v1355
      %v1357 = vadd.f32 %v1326, 1.0
      %v1358 = vadd.f32 %v1328, 1.0
      %v1359 = vadd.f32 %v1330, 1.0
      %v1360 = vadd.f32 %v1332, 1.0
      %v1361 = vadd.f32 %v1334, 1.0
      %v1362 = vadd.f32 %v1336, 1.0
      %v1363 = vadd.f32 %v1338, 1.0
      %v1364 = vadd.f32 %v1340, 1.0
      %v1365 = vadd.f32 %v1342, 1.0
      %v1366 = vadd.f32 %v1344, 1.0
      %v1367 = vadd.f32 %v1346, 1.0
      %v1368 = vadd.f32 %v1348, 1.0
      %v1369 = vadd.f32 %v1350, 1.0
      %v1370 = vadd.f32 %v1352, 1.0
      %v1371 = vadd.f32 %v1354, 1.0
      %v1372 = vadd.f32 %v1356, 1.0
      %v1373 = vrcp.pop %v1357
      %v1374 = vmul.f32 1.0, %v1373
      %v1375 = vrcp.pop %v1358
      %v1376 = vmul.f32 1.0, %v1375
      %v1377 = vrcp.pop %v1359
      %v1378 = vmul.f32 1.0, %v1377
      %v1379 = vrcp.pop %v1360
      %v1380 = vmul.f32 1.0, %v1379
      %v1381 = vrcp.pop %v1361
      %v1382 = vmul.f32 1.0, %v1381
      %v1383 = vrcp.pop %v1362
      %v1384 = vmul.f32 1.0, %v1383
      %v1385 = vrcp.pop %v1363
      %v1386 = vmul.f32 1.0, %v1385
      %v1387 = vrcp.pop %v1364
      %v1388 = vmul.f32 1.0, %v1387
      %v1389 = vrcp.pop %v1365
      %v1390 = vmul.f32 1.0, %v1389
      %v1391 = vrcp.pop %v1366
      %v1392 = vmul.f32 1.0, %v1391
      %v1393 = vrcp.pop %v1367
      %v1394 = vmul.f32 1.0, %v1393
      %v1395 = vrcp.pop %v1368
      %v1396 = vmul.f32 1.0, %v1395
      %v1397 = vrcp.pop %v1369
      %v1398 = vmul.f32 1.0, %v1397
      %v1399 = vrcp.pop %v1370
      %v1400 = vmul.f32 1.0, %v1399
      %v1401 = vrcp.pop %v1371
      %v1402 = vmul.f32 1.0, %v1401
      %v1403 = vrcp.pop %v1372
      %v1404 = vmul.f32 1.0, %v1403
      %v1405 = vmul.f32 %v1374, %v1165
      %v1406 = vmul.f32 %v1376, %v1166
      %v1407 = vmul.f32 %v1378, %v1167
      %v1408 = vmul.f32 %v1380, %v1168
      %v1409 = vmul.f32 %v1382, %v1169
      %v1410 = vmul.f32 %v1384, %v1170
      %v1411 = vmul.f32 %v1386, %v1171
      %v1412 = vmul.f32 %v1388, %v1172
      %v1413 = vmul.f32 %v1390, %v1173
      %v1414 = vmul.f32 %v1392, %v1174
      %v1415 = vmul.f32 %v1394, %v1175
      %v1416 = vmul.f32 %v1396, %v1176
      %v1417 = vmul.f32 %v1398, %v1177
      %v1418 = vmul.f32 %v1400, %v1178
      %v1419 = vmul.f32 %v1402, %v1179
      %v1420 = vmul.f32 %v1404, %v1180
      %v1421 = vsub.f32 1.0, %v1374
      %v1422 = vsub.f32 1.0, %v1376
      %v1423 = vsub.f32 1.0, %v1378
      %v1424 = vsub.f32 1.0, %v1380
      %v1425 = vsub.f32 1.0, %v1382
      %v1426 = vsub.f32 1.0, %v1384
      %v1427 = vsub.f32 1.0, %v1386
      %v1428 = vsub.f32 1.0, %v1388
      %v1429 = vsub.f32 1.0, %v1390
      %v1430 = vsub.f32 1.0, %v1392
      %v1431 = vsub.f32 1.0, %v1394
      %v1432 = vsub.f32 1.0, %v1396
      %v1433 = vsub.f32 1.0, %v1398
      %v1434 = vsub.f32 1.0, %v1400
      %v1435 = vsub.f32 1.0, %v1402
      %v1436 = vsub.f32 1.0, %v1404
      %1437 = vset.pattern.permute.xlu0 36
      %1438 = vperm.xlu0 %1437, %v1163
      %v1439 = vpop.permute.xlu0 %1438
      %v1441 = vmul.f32 %v1421, %v1439
      %v1442 = vmul.f32 %v1422, %v1439
      %v1443 = vmul.f32 %v1423, %v1439
      %v1444 = vmul.f32 %v1424, %v1439
      %v1445 = vmul.f32 %v1425, %v1439
      %v1446 = vmul.f32 %v1426, %v1439
      %v1447 = vmul.f32 %v1427, %v1439
      %v1448 = vmul.f32 %v1428, %v1439
      %v1449 = vmul.f32 %v1429, %v1439
      %v1450 = vmul.f32 %v1430, %v1439
      %v1451 = vmul.f32 %v1431, %v1439
      %v1452 = vmul.f32 %v1432, %v1439
      %v1453 = vmul.f32 %v1433, %v1439
      %v1454 = vmul.f32 %v1434, %v1439
      %v1455 = vmul.f32 %v1435, %v1439
      %v1456 = vmul.f32 %v1436, %v1439
      %v1457 = vmul.f32 %v1441, %v1165
      %v1458 = vmul.f32 %v1442, %v1166
      %v1459 = vmul.f32 %v1443, %v1167
      %v1460 = vmul.f32 %v1444, %v1168
      %v1461 = vmul.f32 %v1445, %v1169
      %v1462 = vmul.f32 %v1446, %v1170
      %v1463 = vmul.f32 %v1447, %v1171
      %v1464 = vmul.f32 %v1448, %v1172
      %v1465 = vmul.f32 %v1449, %v1173
      %v1466 = vmul.f32 %v1450, %v1174
      %v1467 = vmul.f32 %v1451, %v1175
      %v1468 = vmul.f32 %v1452, %v1176
      %v1469 = vmul.f32 %v1453, %v1177
      %v1470 = vmul.f32 %v1454, %v1178
      %v1471 = vmul.f32 %v1455, %v1179
      %v1472 = vmul.f32 %v1456, %v1180
      %v1473 = vadd.f32 %v1405, %v1457
      %v1474 = vadd.f32 %v1406, %v1458
      %v1475 = vadd.f32 %v1407, %v1459
      %v1476 = vadd.f32 %v1408, %v1460
      %v1477 = vadd.f32 %v1409, %v1461
      %v1478 = vadd.f32 %v1410, %v1462
      %v1479 = vadd.f32 %v1411, %v1463
      %v1480 = vadd.f32 %v1412, %v1464
      %v1481 = vadd.f32 %v1413, %v1465
      %v1482 = vadd.f32 %v1414, %v1466
      %v1483 = vadd.f32 %v1415, %v1467
      %v1484 = vadd.f32 %v1416, %v1468
      %v1485 = vadd.f32 %v1417, %v1469
      %v1486 = vadd.f32 %v1418, %v1470
      %v1487 = vadd.f32 %v1419, %v1471
      %v1488 = vadd.f32 %v1420, %v1472
      %v1489 = vpack.c.bf16 %v1474, %v1473
      %v1490 = vpack.c.bf16 %v1476, %v1475
      %v1491 = vpack.c.bf16 %v1478, %v1477
      %v1492 = vpack.c.bf16 %v1480, %v1479
      %v1493 = vpack.c.bf16 %v1482, %v1481
      %v1494 = vpack.c.bf16 %v1484, %v1483
      %v1495 = vpack.c.bf16 %v1486, %v1485
      %v1496 = vpack.c.bf16 %v1488, %v1487
      %v1497 = vld [vmem:[%s452] sm:$0xf]
      %v1498 = vld [vmem:[%s452 + $0x4] sm:$0xf]
      %v1499 = vld [vmem:[%s452 + $0x8] sm:$0xf]
      %v1500 = vld [vmem:[%s452 + $0xc] sm:$0xf]
      %v1501 = vld [vmem:[%s452 + $0x10] sm:$0x3]
      %v1507 = vunpack.c.l.b16 %v1497
      %v1508 = vunpack.c.l.b16 %v1498
      %v1509 = vunpack.c.l.b16 %v1499
      %v1510 = vunpack.c.l.b16 %v1500
      %v1511 = vunpack.c.l.b16 %v1501
      %v1512 = vpack.c.b16 %v1508, %v1507
      %v1513 = vpack.c.b16 %v1510, %v1509
      %v1514 = vpack.c.b16 %v1511, %v1511
      %1517 = vrot.lane.b32.xlu0 %v1163, 91
      %v1518 = vpop.permute.xlu0 %1517
      %v1521 = vsel %vm1181, %v1489, 0
      %v1524 = vsel %vm1181, %v1490, 0
      %v1527 = vsel %vm1181, %v1491, 0
      %v1530 = vsel %vm1181, %v1492, 0
      %v1533 = vsel %vm1181, %v1493, 0
      %v1536 = vsel %vm1181, %v1494, 0
      %v1539 = vsel %vm1181, %v1495, 0
      %v1542 = vsel %vm1181, %v1496, 0
      %vm1544 = vcmask 1041408
      %v1546 = vsel %vm1544, %v1514, 0
      %1548 = vmatprep.subr.bf16.mxu0 0
      %1549 = vmatpush1.bf16.msra.mxu0 %v1512
      %1550 = vmatprep.subr.bf16.mxu0 0
      %1551 = vmatpush1.bf16.msra.mxu0 %v1513
      %1552 = vmatprep.subr.bf16.mxu0 0
      %1553 = vmatpush1.bf16.msra.mxu0 %v1546
      %1554 = vmatprep.subr.bf16.mxu0 0
      %1555 = vmatpush1.bf16.msra.mxu0 0
      %1556 = vmatprep.subr.bf16.mxu0 0
      %1557 = vmatpush1.bf16.msra.mxu0 0
      %1558 = vmatprep.subr.bf16.mxu0 0
      %1559 = vmatpush1.bf16.msra.mxu0 0
      %1560 = vmatprep.subr.bf16.mxu0 0
      %1561 = vmatpush1.bf16.msra.mxu0 0
      %1562 = vmatprep.subr.bf16.mxu0 0
      %1563 = vmatpush1.bf16.msra.mxu0 0
      %1564 = vmatprep.subr.bf16.mxu0 0
      %1565 = vmatpush1.bf16.msra.mxu0 0
      %1566 = vmatprep.subr.bf16.mxu0 0
      %1567 = vmatpush1.bf16.msra.mxu0 0
      %1568 = vmatprep.subr.bf16.mxu0 0
      %1569 = vmatpush1.bf16.msra.mxu0 0
      %1570 = vmatprep.subr.bf16.mxu0 0
      %1571 = vmatpush1.bf16.msra.mxu0 0
      %1572 = vmatprep.subr.bf16.mxu0 0
      %1573 = vmatpush1.bf16.msra.mxu0 0
      %1574 = vmatprep.subr.bf16.mxu0 0
      %1575 = vmatpush1.bf16.msra.mxu0 0
      %1576 = vmatprep.subr.bf16.mxu0 0
      %1577 = vmatpush1.bf16.msra.mxu0 0
      %1578 = vmatprep.subr.bf16.mxu0 0
      %1579 = vmatpush1.bf16.msra.mxu0 0
      %1580 = vmatprep.mubr.bf16.mxu0 0
      %1581 = vmatmul.mubr.bf16.gmra.mrb[0].mxu0 %v1521
      %v1582 = vpop.f32.mrb[0].mxu0
      %v1583 = vadd.f32 %v1518, %v1582
      %v1584 = vpop.f32.mrb[0].mxu0
      %v1585 = vpop.f32.mrb[0].mxu0
      %v1586 = vadd.f32 %v1518, %v1585
      %v1587 = vpop.f32.mrb[0].mxu0
      %1588 = vmatprep.mubr.bf16.mxu0 0
      %1589 = vmatmul.mubr.bf16.gmra.mrb[0].mxu0 %v1524
      %v1590 = vpop.f32.mrb[0].mxu0
      %v1591 = vadd.f32 %v1518, %v1590
      %v1592 = vpop.f32.mrb[0].mxu0
      %v1593 = vpop.f32.mrb[0].mxu0
      %v1594 = vadd.f32 %v1518, %v1593
      %v1595 = vpop.f32.mrb[0].mxu0
      %1596 = vmatprep.mubr.bf16.mxu0 0
      %1597 = vmatmul.mubr.bf16.gmra.mrb[0].mxu0 %v1527
      %v1598 = vpop.f32.mrb[0].mxu0
      %v1599 = vadd.f32 %v1518, %v1598
      %v1600 = vpop.f32.mrb[0].mxu0
      %v1601 = vpop.f32.mrb[0].mxu0
      %v1602 = vadd.f32 %v1518, %v1601
      %v1603 = vpop.f32.mrb[0].mxu0
      %1604 = vmatprep.mubr.bf16.mxu0 0
      %1605 = vmatmul.mubr.bf16.gmra.mrb[0].mxu0 %v1530
      %v1606 = vpop.f32.mrb[0].mxu0
      %v1607 = vadd.f32 %v1518, %v1606
      %v1608 = vpop.f32.mrb[0].mxu0
      %v1609 = vpop.f32.mrb[0].mxu0
      %v1610 = vadd.f32 %v1518, %v1609
      %v1611 = vpop.f32.mrb[0].mxu0
      %1612 = vmatprep.mubr.bf16.mxu0 0
      %1613 = vmatmul.mubr.bf16.gmra.mrb[0].mxu0 %v1533
      %v1614 = vpop.f32.mrb[0].mxu0
      %v1615 = vadd.f32 %v1518, %v1614
      %v1616 = vpop.f32.mrb[0].mxu0
      %v1617 = vpop.f32.mrb[0].mxu0
      %v1618 = vadd.f32 %v1518, %v1617
      %v1619 = vpop.f32.mrb[0].mxu0
      %1620 = vmatprep.mubr.bf16.mxu0 0
      %1621 = vmatmul.mubr.bf16.gmra.mrb[0].mxu0 %v1536
      %v1622 = vpop.f32.mrb[0].mxu0
      %v1623 = vadd.f32 %v1518, %v1622
      %v1624 = vpop.f32.mrb[0].mxu0
      %v1625 = vpop.f32.mrb[0].mxu0
      %v1626 = vadd.f32 %v1518, %v1625
      %v1627 = vpop.f32.mrb[0].mxu0
      %1628 = vmatprep.mubr.bf16.mxu0 0
      %1629 = vmatmul.mubr.bf16.gmra.mrb[0].mxu0 %v1539
      %v1630 = vpop.f32.mrb[0].mxu0
      %v1631 = vadd.f32 %v1518, %v1630
      %v1632 = vpop.f32.mrb[0].mxu0
      %v1633 = vpop.f32.mrb[0].mxu0
      %v1634 = vadd.f32 %v1518, %v1633
      %v1635 = vpop.f32.mrb[0].mxu0
      %1636 = vmatprep.mubr.bf16.mxu0 0
      %1637 = vmatmul.mubr.bf16.gmra.mrb[0].mxu0 %v1542
      %v1638 = vpop.f32.mrb[0].mxu0
      %v1639 = vadd.f32 %v1518, %v1638
      %v1640 = vpop.f32.mrb[0].mxu0
      %v1641 = vpop.f32.mrb[0].mxu0
      %v1642 = vadd.f32 %v1518, %v1641
      %v1643 = vpop.f32.mrb[0].mxu0
      %1644 = vdwg.mxu0
      %v1645 = vld [vmem:[#allocation2] sm:$0xff]
      %v1646 = vld [vmem:[#allocation2 + $0x8] sm:$0xff]
      %v1647 = vld [vmem:[#allocation2 + $0x10] sm:$0xff]
      %v1648 = vld [vmem:[#allocation2 + $0x18] sm:$0xff]
      %v1649 = vld [vmem:[#allocation2 + $0x20] sm:$0xff]
      %v1650 = vld [vmem:[#allocation2 + $0x28] sm:$0xff]
      %v1651 = vld [vmem:[#allocation2 + $0x30] sm:$0xff]
      %v1652 = vld [vmem:[#allocation2 + $0x38] sm:$0xff]
      %v1653 = vld [vmem:[#allocation2 + $0x40] sm:$0xff]
      %v1654 = vld [vmem:[#allocation2 + $0x48] sm:$0xff]
      %v1655 = vld [vmem:[#allocation2 + $0x50] sm:$0xff]
      %v1656 = vld [vmem:[#allocation2 + $0x58] sm:$0xff]
      %v1657 = vld [vmem:[#allocation2 + $0x60] sm:$0xff]
      %v1658 = vld [vmem:[#allocation2 + $0x68] sm:$0xff]
      %v1659 = vld [vmem:[#allocation2 + $0x70] sm:$0xff]
      %v1660 = vld [vmem:[#allocation2 + $0x78] sm:$0xff]
      %1662 = vset.pattern.permute.xlu0 0
      %1663 = vperm.xlu0 %1662, %v1583
      %v1664 = vpop.permute.xlu0 %1663
      %1667 = vset.pattern.permute.xlu0 0
      %1668 = vperm.xlu0 %1667, %v1586
      %v1669 = vpop.permute.xlu0 %1668
      %1672 = vset.pattern.permute.xlu0 0
      %1673 = vperm.xlu0 %1672, %v1591
      %v1674 = vpop.permute.xlu0 %1673
      %1677 = vset.pattern.permute.xlu0 0
      %1678 = vperm.xlu0 %1677, %v1594
      %v1679 = vpop.permute.xlu0 %1678
      %1682 = vset.pattern.permute.xlu0 0
      %1683 = vperm.xlu0 %1682, %v1599
      %v1684 = vpop.permute.xlu0 %1683
      %1687 = vset.pattern.permute.xlu0 0
      %1688 = vperm.xlu0 %1687, %v1602
      %v1689 = vpop.permute.xlu0 %1688
      %1692 = vset.pattern.permute.xlu0 0
      %1693 = vperm.xlu0 %1692, %v1607
      %v1694 = vpop.permute.xlu0 %1693
      %1697 = vset.pattern.permute.xlu0 0
      %1698 = vperm.xlu0 %1697, %v1610
      %v1699 = vpop.permute.xlu0 %1698
      %1702 = vset.pattern.permute.xlu0 0
      %1703 = vperm.xlu0 %1702, %v1615
      %v1704 = vpop.permute.xlu0 %1703
      %1707 = vset.pattern.permute.xlu0 0
      %1708 = vperm.xlu0 %1707, %v1618
      %v1709 = vpop.permute.xlu0 %1708
      %1712 = vset.pattern.permute.xlu0 0
      %1713 = vperm.xlu0 %1712, %v1623
      %v1714 = vpop.permute.xlu0 %1713
      %1717 = vset.pattern.permute.xlu0 0
      %1718 = vperm.xlu0 %1717, %v1626
      %v1719 = vpop.permute.xlu0 %1718
      %1722 = vset.pattern.permute.xlu0 0
      %1723 = vperm.xlu0 %1722, %v1631
      %v1724 = vpop.permute.xlu0 %1723
      %1727 = vset.pattern.permute.xlu0 0
      %1728 = vperm.xlu0 %1727, %v1634
      %v1729 = vpop.permute.xlu0 %1728
      %1732 = vset.pattern.permute.xlu0 0
      %1733 = vperm.xlu0 %1732, %v1639
      %v1734 = vpop.permute.xlu0 %1733
      %1737 = vset.pattern.permute.xlu0 0
      %1738 = vperm.xlu0 %1737, %v1642
      %v1739 = vpop.permute.xlu0 %1738
      %v1741 = vmul.f32 %v1664, %v1645
      %v1742 = vmul.f32 %v1669, %v1646
      %v1743 = vmul.f32 %v1674, %v1647
      %v1744 = vmul.f32 %v1679, %v1648
      %v1745 = vmul.f32 %v1684, %v1649
      %v1746 = vmul.f32 %v1689, %v1650
      %v1747 = vmul.f32 %v1694, %v1651
      %v1748 = vmul.f32 %v1699, %v1652
      %v1749 = vmul.f32 %v1704, %v1653
      %v1750 = vmul.f32 %v1709, %v1654
      %v1751 = vmul.f32 %v1714, %v1655
      %v1752 = vmul.f32 %v1719, %v1656
      %v1753 = vmul.f32 %v1724, %v1657
      %v1754 = vmul.f32 %v1729, %v1658
      %v1755 = vmul.f32 %v1734, %v1659
      %v1756 = vmul.f32 %v1739, %v1660
      %v1757 = vsel %vm493, %v1741, 0.0
      %v1758 = vsel %vm493, %v1742, 0.0
      %v1759 = vadd.f32 %v1757, %v1758
      %v1760 = vsel %vm493, %v1743, 0.0
      %v1761 = vadd.f32 %v1759, %v1760
      %v1762 = vsel %vm493, %v1744, 0.0
      %v1763 = vadd.f32 %v1761, %v1762
      %v1764 = vrot.slane %v1763, 4
      %v1765 = vadd.f32 %v1763, %v1764
      %v1766 = vrot.slane %v1765, 2
      %v1767 = vadd.f32 %v1765, %v1766
      %v1768 = vrot.slane %v1767, 1
      %v1769 = vadd.f32 %v1767, %v1768
      %v1770 = vsel %vm493, %v1745, 0.0
      %v1771 = vsel %vm493, %v1746, 0.0
      %v1772 = vadd.f32 %v1770, %v1771
      %v1773 = vsel %vm493, %v1747, 0.0
      %v1774 = vadd.f32 %v1772, %v1773
      %v1775 = vsel %vm493, %v1748, 0.0
      %v1776 = vadd.f32 %v1774, %v1775
      %v1777 = vrot.slane %v1776, 4
      %v1778 = vadd.f32 %v1776, %v1777
      %v1779 = vrot.slane %v1778, 2
      %v1780 = vadd.f32 %v1778, %v1779
      %v1781 = vrot.slane %v1780, 1
      %v1782 = vadd.f32 %v1780, %v1781
      %v1783 = vsel %vm493, %v1749, 0.0
      %v1784 = vsel %vm493, %v1750, 0.0
      %v1785 = vadd.f32 %v1783, %v1784
      %v1786 = vsel %vm493, %v1751, 0.0
      %v1787 = vadd.f32 %v1785, %v1786
      %v1788 = vsel %vm493, %v1752, 0.0
      %v1789 = vadd.f32 %v1787, %v1788
      %v1790 = vrot.slane %v1789, 4
      %v1791 = vadd.f32 %v1789, %v1790
      %v1792 = vrot.slane %v1791, 2
      %v1793 = vadd.f32 %v1791, %v1792
      %v1794 = vrot.slane %v1793, 1
      %v1795 = vadd.f32 %v1793, %v1794
      %v1796 = vsel %vm493, %v1753, 0.0
      %v1797 = vsel %vm493, %v1754, 0.0
      %v1798 = vadd.f32 %v1796, %v1797
      %v1799 = vsel %vm493, %v1755, 0.0
      %v1800 = vadd.f32 %v1798, %v1799
      %v1801 = vsel %vm493, %v1756, 0.0
      %v1802 = vadd.f32 %v1800, %v1801
      %v1803 = vrot.slane %v1802, 4
      %v1804 = vadd.f32 %v1802, %v1803
      %v1805 = vrot.slane %v1804, 2
      %v1806 = vadd.f32 %v1804, %v1805
      %v1807 = vrot.slane %v1806, 1
      %v1808 = vadd.f32 %v1806, %v1807
      %v1809 = vld [vmem:[%s10] sm:$0x1]
      %p1810 = scmp.eq.s32.totalorder %s22, 0
      // Predicated region
      $region65: #{tpu_custom_call.1} parent=63 // pred_check
        %p1811 = pneg %p1810
      $region66: #{tpu_custom_call.1} parent=63 // pred_check_branch
        %1813 = sbr.rel (%p1811) target = $region68
      $region67: #{tpu_custom_call.1} parent=63 // pred_region
        %v1814 = vld [vmem:[%s5] sm:$0x3]
        %v1815 = vld [vmem:[%s7] sm:$0xf]
        %v1816 = vld [vmem:[%s7 + $0x4] sm:$0xf]
        %v1818 = vlaneseq
        %v1819 = vshrl.u32 %v1818, 7
        %v1820 = vsub.s32 0, %v1819
        %v1821 = vrot.slane %v1809, %v1820
        %v1825 = vunpack.c.l.b16 %v1815
        %v1826 = vunpack.c.l.b16 %v1816
        %v1827 = vpack.c.b16 %v1826, %v1825
        %vm1829 = vcmask 130048
        %v1831 = vsel %vm1829, %v1814, 0
        %1833 = vmatprep.subr.bf16.mxu0 0
        %1834 = vmatpush1.bf16.msra.mxu0 %v1827
        %1835 = vmatprep.subr.bf16.mxu0 0
        %1836 = vmatpush1.bf16.msra.mxu0 0
        %1837 = vmatprep.subr.bf16.mxu0 0
        %1838 = vmatpush1.bf16.msra.mxu0 0
        %1839 = vmatprep.subr.bf16.mxu0 0
        %1840 = vmatpush1.bf16.msra.mxu0 0
        %1841 = vmatprep.subr.bf16.mxu0 0
        %1842 = vmatpush1.bf16.msra.mxu0 0
        %1843 = vmatprep.subr.bf16.mxu0 0
        %1844 = vmatpush1.bf16.msra.mxu0 0
        %1845 = vmatprep.subr.bf16.mxu0 0
        %1846 = vmatpush1.bf16.msra.mxu0 0
        %1847 = vmatprep.subr.bf16.mxu0 0
        %1848 = vmatpush1.bf16.msra.mxu0 0
        %1849 = vmatprep.subr.bf16.mxu0 0
        %1850 = vmatpush1.bf16.msra.mxu0 0
        %1851 = vmatprep.subr.bf16.mxu0 0
        %1852 = vmatpush1.bf16.msra.mxu0 0
        %1853 = vmatprep.subr.bf16.mxu0 0
        %1854 = vmatpush1.bf16.msra.mxu0 0
        %1855 = vmatprep.subr.bf16.mxu0 0
        %1856 = vmatpush1.bf16.msra.mxu0 0
        %1857 = vmatprep.subr.bf16.mxu0 0
        %1858 = vmatpush1.bf16.msra.mxu0 0
        %1859 = vmatprep.subr.bf16.mxu0 0
        %1860 = vmatpush1.bf16.msra.mxu0 0
        %1861 = vmatprep.subr.bf16.mxu0 0
        %1862 = vmatpush1.bf16.msra.mxu0 0
        %1863 = vmatprep.subr.bf16.mxu0 0
        %1864 = vmatpush1.bf16.msra.mxu0 0
        %1865 = vmatprep.mubr.bf16.mxu0 0
        %1866 = vmatmul.mubr.bf16.gmra.mrb[0].mxu0 %v1831
        %v1867 = vpop.f32.mrb[0].mxu0
        %v1868 = vadd.f32 %v1821, %v1867
        %v1869 = vpop.f32.mrb[0].mxu0
        %v1870 = vpop.f32.mrb[0].mxu0
        %v1871 = vpop.f32.mrb[0].mxu0
        %1872 = vdwg.mxu0
        %vm1873 = vcmask 257024
        %1874 = vst.msk [vmem:[#allocation3] sm:$0xf] %vm1873, %v1868
      $region68: #{tpu_custom_call.1} parent=63 // pred_fallthru
        _
      %v1875 = vld [vmem:[#allocation3] sm:$0xf]
      %v1876 = vpack.c.bf16 %v1769, %v1769
      %v1877 = vpack.c.bf16 %v1782, %v1782
      %v1878 = vpack.c.bf16 %v1795, %v1795
      %v1879 = vpack.c.bf16 %v1808, %v1808
      %v1880 = vld [vmem:[%s459] sm:$0xf]
      %v1885 = vunpack.c.l.b16 %v1876
      %v1886 = vunpack.c.l.b16 %v1877
      %v1887 = vunpack.c.l.b16 %v1878
      %v1888 = vunpack.c.l.b16 %v1879
      %vm1889 = vcmask 1041409
      %v1890 = vsel %vm1889, %v1886, %v1885
      %vm1891 = vcmask 1042434
      %v1892 = vsel %vm1891, %v1887, %v1890
      %vm1893 = vcmask 1043459
      %v1894 = vsel %vm1893, %v1888, %v1892
      %v1895 = vpack.c.b16 %v1894, %v1894
      %v1897 = vsel %vm493, %v1895, 0
      %v1900 = vsel %vm570, %v1880, 0
      %1902 = vmatprep.subr.bf16.mxu0 0
      %1903 = vmatpush1.bf16.msra.mxu0 %v1900
      %1904 = vmatprep.subr.bf16.mxu0 0
      %1905 = vmatpush1.bf16.msra.mxu0 0
      %1906 = vmatprep.subr.bf16.mxu0 0
      %1907 = vmatpush1.bf16.msra.mxu0 0
      %1908 = vmatprep.subr.bf16.mxu0 0
      %1909 = vmatpush1.bf16.msra.mxu0 0
      %1910 = vmatprep.subr.bf16.mxu0 0
      %1911 = vmatpush1.bf16.msra.mxu0 0
      %1912 = vmatprep.subr.bf16.mxu0 0
      %1913 = vmatpush1.bf16.msra.mxu0 0
      %1914 = vmatprep.subr.bf16.mxu0 0
      %1915 = vmatpush1.bf16.msra.mxu0 0
      %1916 = vmatprep.subr.bf16.mxu0 0
      %1917 = vmatpush1.bf16.msra.mxu0 0
      %1918 = vmatprep.subr.bf16.mxu0 0
      %1919 = vmatpush1.bf16.msra.mxu0 0
      %1920 = vmatprep.subr.bf16.mxu0 0
      %1921 = vmatpush1.bf16.msra.mxu0 0
      %1922 = vmatprep.subr.bf16.mxu0 0
      %1923 = vmatpush1.bf16.msra.mxu0 0
      %1924 = vmatprep.subr.bf16.mxu0 0
      %1925 = vmatpush1.bf16.msra.mxu0 0
      %1926 = vmatprep.subr.bf16.mxu0 0
      %1927 = vmatpush1.bf16.msra.mxu0 0
      %1928 = vmatprep.subr.bf16.mxu0 0
      %1929 = vmatpush1.bf16.msra.mxu0 0
      %1930 = vmatprep.subr.bf16.mxu0 0
      %1931 = vmatpush1.bf16.msra.mxu0 0
      %1932 = vmatprep.subr.bf16.mxu0 0
      %1933 = vmatpush1.bf16.msra.mxu0 0
      %1934 = vmatprep.mubr.bf16.mxu0 0
      %1935 = vmatmul.mubr.bf16.gmra.mrb[0].mxu0 %v1897
      %v1936 = vpop.f32.mrb[0].mxu0
      %v1937 = vadd.f32 0.0, %v1936
      %v1938 = vpop.f32.mrb[0].mxu0
      %v1939 = vpop.f32.mrb[0].mxu0
      %v1940 = vpop.f32.mrb[0].mxu0
      %1941 = vdwg.mxu0
      %v1942 = vadd.f32 %v1875, %v1937
      %vm1943 = vcmask 257024
      %1944 = vst.msk [vmem:[#allocation3] sm:$0xf] %vm1943, %v1942
      %p1945 = scmp.eq.s32.totalorder %s22, 1
      // Predicated region
      $region69: #{tpu_custom_call.1} parent=63 // pred_check
        %p1946 = pneg %p1945
      $region70: #{tpu_custom_call.1} parent=63 // pred_check_branch
        %1948 = sbr.rel (%p1946) target = $region72
      $region71: #{tpu_custom_call.1} parent=63 // pred_region
        %v1949 = vld [vmem:[#allocation3] sm:$0xf]
        %v1950 = vsel %vm1943, %v1949, 0.0
        %v1951 = vrot.slane %v1950, 4
        %v1952 = vadd.f32 %v1950, %v1951
        %v1953 = vrot.slane %v1952, 2
        %v1954 = vadd.f32 %v1952, %v1953
        %v1955 = vrot.slane %v1954, 1
        %v1956 = vadd.f32 %v1954, %v1955
        %v1957 = vrcp.pop 4.0
        %v1958 = vmul.f32 %v1956, %v1957
        %v1959 = vsub.f32 %v1949, %v1958
        %v1960 = vmul.f32 %v1959, %v1959
        %v1961 = vsel %vm1943, %v1960, 0.0
        %v1962 = vrot.slane %v1961, 4
        %v1963 = vadd.f32 %v1961, %v1962
        %v1964 = vrot.slane %v1963, 2
        %v1965 = vadd.f32 %v1963, %v1964
        %v1966 = vrot.slane %v1965, 1
        %v1967 = vadd.f32 %v1965, %v1966
        %v1968 = vmul.f32 %v1967, %v1957
        %v1969 = vadd.f32 %v1968, 1e-08
        %v1970 = vrsqrt.pop %v1969
        %v1971 = vmul.f32 %v1959, %v1970
        %v1972 = vxor.u32 %v1971, 2147483648
        %v1973 = vmul.f32 %v1972, 1.442695
        %v1974 = vpow.pop %v1973
        %v1975 = vadd.f32 %v1974, 1.0
        %v1976 = vrcp.pop %v1975
        %v1977 = vmul.f32 1.0, %v1976
        %v1978 = vmul.f32 %v1977, %v1949
        %v1979 = vsub.f32 1.0, %v1977
        %v1981 = vlaneseq
        %v1982 = vshrl.u32 %v1981, 7
        %v1983 = vsub.s32 0, %v1982
        %v1984 = vrot.slane %v1809, %v1983
        %1985 = vset.pattern.permute.xlu0 32
        %1986 = vperm.xlu0 %1985, %v1984
        %v1987 = vpop.permute.xlu0 %1986
        %v1989 = vmul.f32 %v1979, %v1987
        %v1990 = vmul.f32 %v1989, %v1949
        %v1991 = vadd.f32 %v1978, %v1990
        %v1992 = vpack.c.bf16 %v1991, %v1991
        %v1993 = vld [vmem:[%s8] sm:$0xf]
        %v1994 = vld [vmem:[%s8 + $0x4] sm:$0xf]
        %v1995 = vld [vmem:[%s8 + $0x8] sm:$0xf]
        %v1996 = vld [vmem:[%s8 + $0xc] sm:$0xf]
        %v2001 = vunpack.c.l.b16 %v1993
        %v2002 = vunpack.c.l.b16 %v1994
        %v2003 = vunpack.c.l.b16 %v1995
        %v2004 = vunpack.c.l.b16 %v1996
        %v2005 = vpack.c.b16 %v2002, %v2001
        %v2006 = vpack.c.b16 %v2004, %v2003
        %2009 = vrot.lane.b32.xlu0 %v1984, 95
        %v2010 = vpop.permute.xlu0 %2009
        %vm2012 = vcmask 261120
        %v2014 = vsel %vm2012, %v1992, 0
        %2016 = vmatprep.subr.bf16.mxu0 0
        %2017 = vmatpush1.bf16.msra.mxu0 %v2005
        %2018 = vmatprep.subr.bf16.mxu0 0
        %2019 = vmatpush1.bf16.msra.mxu0 %v2006
        %2020 = vmatprep.subr.bf16.mxu0 0
        %2021 = vmatpush1.bf16.msra.mxu0 0
        %2022 = vmatprep.subr.bf16.mxu0 0
        %2023 = vmatpush1.bf16.msra.mxu0 0
        %2024 = vmatprep.subr.bf16.mxu0 0
        %2025 = vmatpush1.bf16.msra.mxu0 0
        %2026 = vmatprep.subr.bf16.mxu0 0
        %2027 = vmatpush1.bf16.msra.mxu0 0
        %2028 = vmatprep.subr.bf16.mxu0 0
        %2029 = vmatpush1.bf16.msra.mxu0 0
        %2030 = vmatprep.subr.bf16.mxu0 0
        %2031 = vmatpush1.bf16.msra.mxu0 0
        %2032 = vmatprep.subr.bf16.mxu0 0
        %2033 = vmatpush1.bf16.msra.mxu0 0
        %2034 = vmatprep.subr.bf16.mxu0 0
        %2035 = vmatpush1.bf16.msra.mxu0 0
        %2036 = vmatprep.subr.bf16.mxu0 0
        %2037 = vmatpush1.bf16.msra.mxu0 0
        %2038 = vmatprep.subr.bf16.mxu0 0
        %2039 = vmatpush1.bf16.msra.mxu0 0
        %2040 = vmatprep.subr.bf16.mxu0 0
        %2041 = vmatpush1.bf16.msra.mxu0 0
        %2042 = vmatprep.subr.bf16.mxu0 0
        %2043 = vmatpush1.bf16.msra.mxu0 0
        %2044 = vmatprep.subr.bf16.mxu0 0
        %2045 = vmatpush1.bf16.msra.mxu0 0
        %2046 = vmatprep.subr.bf16.mxu0 0
        %2047 = vmatpush1.bf16.msra.mxu0 0
        %2048 = vmatprep.mubr.bf16.mxu0 0
        %2049 = vmatmul.mubr.bf16.gmra.mrb[0].mxu0 %v2014
        %v2050 = vpop.f32.mrb[0].mxu0
        %v2051 = vadd.f32 %v2010, %v2050
        %v2052 = vpop.f32.mrb[0].mxu0
        %v2053 = vpop.f32.mrb[0].mxu0
        %v2054 = vpop.f32.mrb[0].mxu0
        %2055 = vdwg.mxu0
        %vm2056 = vcmask 125952
        %v2057 = vsel %vm2056, %v2051, 0.0
        %v2058 = vrot.slane %v2057, 4
        %v2059 = vadd.f32 %v2057, %v2058
        %v2060 = vrot.slane %v2059, 2
        %v2061 = vadd.f32 %v2059, %v2060
        %v2062 = vrot.slane %v2061, 1
        %v2063 = vadd.f32 %v2061, %v2062
        %v2064 = vmul.f32 %v2063, %v1957
        %v2065 = vsub.f32 %v2051, %v2064
        %v2066 = vmul.f32 %v2065, %v2065
        %v2067 = vsel %vm2056, %v2066, 0.0
        %v2068 = vrot.slane %v2067, 4
        %v2069 = vadd.f32 %v2067, %v2068
        %v2070 = vrot.slane %v2069, 2
        %v2071 = vadd.f32 %v2069, %v2070
        %v2072 = vrot.slane %v2071, 1
        %v2073 = vadd.f32 %v2071, %v2072
        %v2074 = vmul.f32 %v2073, %v1957
        %v2075 = vadd.f32 %v2074, 1e-08
        %v2076 = vrsqrt.pop %v2075
        %v2077 = vmul.f32 %v2065, %v2076
        %v2078 = vxor.u32 %v2077, 2147483648
        %v2079 = vmul.f32 %v2078, 1.442695
        %v2080 = vpow.pop %v2079
        %v2081 = vadd.f32 %v2080, 1.0
        %v2082 = vrcp.pop %v2081
        %v2083 = vmul.f32 1.0, %v2082
        %v2084 = vmul.f32 %v2083, %v2051
        %v2085 = vsub.f32 1.0, %v2083
        %2086 = vset.pattern.permute.xlu0 49
        %2087 = vperm.xlu0 %2086, %v1984
        %v2088 = vpop.permute.xlu0 %2087
        %v2090 = vmul.f32 %v2085, %v2088
        %v2091 = vmul.f32 %v2090, %v2051
        %v2092 = vadd.f32 %v2084, %v2091
        %v2093 = vpack.c.bf16 %v2092, %v2092
        %v2094 = vld [vmem:[%s9] sm:$0xf]
        %v2095 = vld [vmem:[%s9 + $0x4] sm:$0xf]
        %v2098 = vunpack.c.l.b16 %v2094
        %v2099 = vunpack.c.l.b16 %v2095
        %v2100 = vpack.c.b16 %v2099, %v2098
        %2102 = vrot.lane.b32.xlu0 %v1984, 78
        %v2103 = vpop.permute.xlu0 %2102
        %vm2105 = vcmask 130048
        %v2107 = vsel %vm2105, %v2093, 0
        %2109 = vmatprep.subr.bf16.mxu0 0
        %2110 = vmatpush1.bf16.msra.mxu0 %v2100
        %2111 = vmatprep.subr.bf16.mxu0 0
        %2112 = vmatpush1.bf16.msra.mxu0 0
        %2113 = vmatprep.subr.bf16.mxu0 0
        %2114 = vmatpush1.bf16.msra.mxu0 0
        %2115 = vmatprep.subr.bf16.mxu0 0
        %2116 = vmatpush1.bf16.msra.mxu0 0
        %2117 = vmatprep.subr.bf16.mxu0 0
        %2118 = vmatpush1.bf16.msra.mxu0 0
        %2119 = vmatprep.subr.bf16.mxu0 0
        %2120 = vmatpush1.bf16.msra.mxu0 0
        %2121 = vmatprep.subr.bf16.mxu0 0
        %2122 = vmatpush1.bf16.msra.mxu0 0
        %2123 = vmatprep.subr.bf16.mxu0 0
        %2124 = vmatpush1.bf16.msra.mxu0 0
        %2125 = vmatprep.subr.bf16.mxu0 0
        %2126 = vmatpush1.bf16.msra.mxu0 0
        %2127 = vmatprep.subr.bf16.mxu0 0
        %2128 = vmatpush1.bf16.msra.mxu0 0
        %2129 = vmatprep.subr.bf16.mxu0 0
        %2130 = vmatpush1.bf16.msra.mxu0 0
        %2131 = vmatprep.subr.bf16.mxu0 0
        %2132 = vmatpush1.bf16.msra.mxu0 0
        %2133 = vmatprep.subr.bf16.mxu0 0
        %2134 = vmatpush1.bf16.msra.mxu0 0
        %2135 = vmatprep.subr.bf16.mxu0 0
        %2136 = vmatpush1.bf16.msra.mxu0 0
        %2137 = vmatprep.subr.bf16.mxu0 0
        %2138 = vmatpush1.bf16.msra.mxu0 0
        %2139 = vmatprep.subr.bf16.mxu0 0
        %2140 = vmatpush1.bf16.msra.mxu0 0
        %2141 = vmatprep.mubr.bf16.mxu0 0
        %2142 = vmatmul.mubr.bf16.gmra.mrb[0].mxu0 %v2107
        %v2143 = vpop.f32.mrb[0].mxu0
        %v2144 = vadd.f32 %v2103, %v2143
        %v2145 = vpop.f32.mrb[0].mxu0
        %v2146 = vpop.f32.mrb[0].mxu0
        %v2147 = vpop.f32.mrb[0].mxu0
        %2148 = vdwg.mxu0
        %v2149 = vxor.u32 %v2144, 2147483648
        %v2150 = vmul.f32 %v2149, 1.442695
        %v2151 = vpow.pop %v2150
        %v2152 = vadd.f32 %v2151, 1.0
        %v2153 = vrcp.pop %v2152
        %v2154 = vmul.f32 1.0, %v2153
        %vm2155 = vcmask 3072
        %2156 = vst.msk [vmem:[%s11] sm:$0xf] %vm2155, %v2154
      $region72: #{tpu_custom_call.1} parent=63 // pred_fallthru
        _
      // Predicated region
      $region73: #{tpu_custom_call.1} parent=63 // pred_check
        %p2157 = pneg %p296
      $region74: #{tpu_custom_call.1} parent=63 // pred_check_branch
        %2159 = sbr.rel (%p2157) target = $region76
      $region75: #{tpu_custom_call.1} parent=63 // pred_region
        _
      $region76: #{tpu_custom_call.1} parent=63 // pred_fallthru
        _
      // Predicated region
      $region77: #{tpu_custom_call.1} parent=63 // pred_check
        %p2160 = pneg %p296
      $region78: #{tpu_custom_call.1} parent=63 // pred_check_branch
        %2162 = sbr.rel (%p2160) target = $region80
      $region79: #{tpu_custom_call.1} parent=63 // pred_region
        _
      $region80: #{tpu_custom_call.1} parent=63 // pred_fallthru
        _
    $region64: #{tpu_custom_call.1} parent=5 // pred_fallthru
      _
    %p2163 = scmp.le.s32.totalorder 2, %s17
    // Predicated region
    $region81: #{tpu_custom_call.1} parent=5 // pred_check
      %p2164 = pneg %p2163
    $region82: #{tpu_custom_call.1} parent=5 // pred_check_branch
      %2166 = sbr.rel (%p2164) target = $region84
    $region83: #{tpu_custom_call.1} parent=5 // pred_region
      %s2167 = ssub.s32 %s17, 2
    $region84: #{tpu_custom_call.1} parent=5 // pred_fallthru
      _
  $region6: #{tpu_custom_call.1} parent=0 // loop_footer
    %s21 = sadd.s32 1, %s17
  $region7: #{tpu_custom_call.1} parent=0 // loop_footer_branch
    %16 = sbr.rel target = $region3
  $region8: #{tpu_custom_call.1} parent=0 // loop_exit
    _

</llo_original>
